<compile_context>
chip_gen: v7x
topology: tpu7x:2x2x1
jax: 0.10.0
libtpu: 0.0.40
codegen_flags: <defaults>
</compile_context>

<pallas_src>
import functools
import math

import jax
import jax.numpy as jnp
from jax import lax
from jax.experimental import pallas as pl
from jax.experimental.pallas import tpu as pltpu


def _mha_kernel(x_ref, wqkv_ref, bqkv_ref, wo_ref, bo_ref, o_ref, *,
                num_heads, head_size, batch_block, seq_len):
    # x_ref:    (Bb, S, H)      wqkv_ref: (H, 3H)   bqkv_ref: (1, 3H) f32
    # wo_ref:   (H, H)          bo_ref:   (1, H) f32
    # o_ref:    (Bb, S, H)
    Bb, S = batch_block, seq_len
    H = num_heads * head_size
    hs = head_size
    compute_dtype = x_ref.dtype

    x = x_ref[...].reshape(Bb * S, H)                          # (Bb*S, H)

    # ---- fused QKV projection: one lane-dense (H, 3H) matmul, f32 accumulate.
    qkv = jnp.dot(x, wqkv_ref[...], preferred_element_type=jnp.float32)
    qkv = (qkv + bqkv_ref[...]).astype(compute_dtype)          # (Bb*S, 3H)
    # Leading-dim split only: layout-compatible (S is the new sublane dim).
    qkv3 = qkv.reshape(Bb, S, 3 * H)                           # (Bb, S, 3H)

    # ---- attention: loop over heads only; batch over Bb inside each einsum.
    heads = []
    for h in range(num_heads):
        c0 = h * hs
        qh = qkv3[:, :, 0 * H + c0: 0 * H + c0 + hs]           # (Bb, S, hs)
        kh = qkv3[:, :, 1 * H + c0: 1 * H + c0 + hs]           # (Bb, S, hs)
        vh = qkv3[:, :, 2 * H + c0: 2 * H + c0 + hs]           # (Bb, S, hs)

        # Contract last dims of q and k directly (no explicit transpose /
        # XLU work); batched over the Bb batch elements in one MXU call.
        scores = jnp.einsum("bqd,bkd->bqk", qh, kh,
                            preferred_element_type=jnp.float32)  # (Bb, S, S) f32

        m = jnp.max(scores, axis=-1, keepdims=True)
        p = jnp.exp(scores - m)                                # EUP
        denom = jnp.sum(p, axis=-1, keepdims=True)
        probs = p * pl.reciprocal(denom, approx=True)          # EUP, not VALU div

        ctx_h = jnp.einsum("bqk,bkd->bqd", probs.astype(compute_dtype), vh,
                           preferred_element_type=jnp.float32)   # (Bb, S, hs) f32
        heads.append(ctx_h)

    ctx = jnp.concatenate(heads, axis=-1).reshape(Bb * S, H)   # (Bb*S, H) f32

    # ---- single fused output projection: K = H (full contraction rows).
    out = jnp.dot(ctx.astype(wo_ref.dtype), wo_ref[...],
                  preferred_element_type=jnp.float32) + bo_ref[...]
    o_ref[...] = out.reshape(Bb, S, H).astype(o_ref.dtype)


def multi_head_attention(x, params, num_heads, *, batch_block=1,
                         compute_dtype=None):
    """x: (B, S, H); params: torch-style Linear weights/biases (out, in)."""
    B, S, H = x.shape
    hs = H // num_heads
    assert H % num_heads == 0, "hidden must be divisible by num_heads"
    assert B % batch_block == 0, "batch_block must divide batch"
    out_dtype = x.dtype
    if compute_dtype is None:
        compute_dtype = x.dtype

    scale = 1.0 / math.sqrt(hs)
    # Lane-dense fused QKV weight (H, 3H); softmax scale folded into Q half.
    w_qkv = jnp.concatenate(
        [params["wq"].T * scale, params["wk"].T, params["wv"].T], axis=1)
    b_qkv = jnp.concatenate(
        [params["bq"] * scale, params["bk"], params["bv"]]).reshape(1, 3 * H)
    w_o = params["wo"].T                                        # (H, H)
    b_o = params["bo"].reshape(1, H)

    x_c = x.astype(compute_dtype)
    w_qkv = w_qkv.astype(compute_dtype)
    w_o = w_o.astype(compute_dtype)
    b_qkv = b_qkv.astype(jnp.float32)
    b_o = b_o.astype(jnp.float32)

    kernel = functools.partial(
        _mha_kernel, num_heads=num_heads, head_size=hs,
        batch_block=batch_block, seq_len=S)

    wmap = lambda i: (0, 0)
    return pl.pallas_call(
        kernel,
        out_shape=jax.ShapeDtypeStruct((B, S, H), out_dtype),
        grid_spec=pltpu.PrefetchScalarGridSpec(
            num_scalar_prefetch=0,
            grid=(B // batch_block,),
            in_specs=[
                pl.BlockSpec((batch_block, S, H), lambda i: (i, 0, 0)),  # x
                pl.BlockSpec((H, 3 * H), wmap),                          # w_qkv
                pl.BlockSpec((1, 3 * H), wmap),                          # b_qkv
                pl.BlockSpec((H, H), wmap),                              # w_o
                pl.BlockSpec((1, H), wmap),                              # b_o
            ],
            out_specs=pl.BlockSpec((batch_block, S, H), lambda i: (i, 0, 0)),
        ),
        compiler_params=pltpu.CompilerParams(
            dimension_semantics=("parallel",)),
    )(x_c, w_qkv, b_qkv, w_o, b_o)


def _reference(x, params, num_heads):
    """Pure-JAX replica of the PyTorch forward (eval mode) for validation."""
    B, S, H = x.shape
    hs = H // num_heads
    q = x @ params["wq"].T + params["bq"]
    k = x @ params["wk"].T + params["bk"]
    v = x @ params["wv"].T + params["bv"]

    def to_heads(t):
        return t.reshape(B, S, num_heads, hs).transpose(0, 2, 1, 3)

    q, k, v = to_heads(q), to_heads(k), to_heads(v)
    scores = jnp.einsum("bhqd,bhkd->bhqk", q, k) / math.sqrt(hs)
    attn = jax.nn.softmax(scores, axis=-1)
    ctx = jnp.einsum("bhqk,bhkd->bhqd", attn, v)
    ctx = ctx.transpose(0, 2, 1, 3).reshape(B, S, H)
    return ctx @ params["wo"].T + params["bo"]


if __name__ == "__main__":
    # Small, module-consistent shapes: batch=4, seq=16, n_embd=128, n_head=4.
    B, S, H, NH = 4, 16, 128, 4

    key = jax.random.PRNGKey(0)
    ks = jax.random.split(key, 9)
    bound = 1.0 / math.sqrt(H)
    params = {
        "wq": jax.random.uniform(ks[0], (H, H), jnp.float32, -bound, bound),
        "bq": jax.random.uniform(ks[1], (H,), jnp.float32, -bound, bound),
        "wk": jax.random.uniform(ks[2], (H, H), jnp.float32, -bound, bound),
        "bk": jax.random.uniform(ks[3], (H,), jnp.float32, -bound, bound),
        "wv": jax.random.uniform(ks[4], (H, H), jnp.float32, -bound, bound),
        "bv": jax.random.uniform(ks[5], (H,), jnp.float32, -bound, bound),
        "wo": jax.random.uniform(ks[6], (H, H), jnp.float32, -bound, bound),
        "bo": jax.random.uniform(ks[7], (H,), jnp.float32, -bound, bound),
    }
    x = jax.random.normal(ks[8], (B, S, H), jnp.float32)

    ref = _reference(x, params, NH)

    # f32 path: 2 batch elements per grid step (M = 32 rows), 2 parallel grid
    # steps (covers both TensorCores on v7x).
    out = multi_head_attention(x, params, NH, batch_block=2)
    out = jax.block_until_ready(out)
    assert out.shape == (B, S, H)
    assert jnp.allclose(out, ref, atol=2e-3, rtol=2e-3), "f32 mismatch vs reference"

    # bf16 matmul path (f32 softmax + f32 accumulation), looser tolerance.
    out_bf16 = multi_head_attention(x, params, NH, batch_block=2,
                                    compute_dtype=jnp.bfloat16)
    out_bf16 = jax.block_until_ready(out_bf16)
    assert jnp.allclose(out_bf16, ref, atol=1e-1, rtol=1e-1), "bf16 mismatch vs reference"

    print("KERNEL_OK")
</pallas_src>

<mosaic_0001>
module attributes {stable_mosaic.version = 11 : i64} {
  func.func @_mha_kernel(%arg0: i32, %arg1: memref<2x16x128xf32, #tpu.memory_space<vmem>>, %arg2: memref<128x384xf32, #tpu.memory_space<vmem>>, %arg3: memref<1x384xf32, #tpu.memory_space<vmem>>, %arg4: memref<128x128xf32, #tpu.memory_space<vmem>>, %arg5: memref<1x128xf32, #tpu.memory_space<vmem>>, %arg6: memref<2x16x128xf32, #tpu.memory_space<vmem>>) attributes {dimension_semantics = [#tpu.dimension_semantics<parallel>], iteration_bounds = array<i64: 2>, scalar_prefetch = 0 : i64, scratch_operands = 0 : i64, tpu.core_type = #tpu.core_type<tc>, window_params = [{transform_indices = @transform_0, window_bounds = array<i64: 2, 16, 128>}, {pipeline_mode = #tpu.pipeline_mode<synchronous>, transform_indices = @transform_1, window_bounds = array<i64: 128, 384>}, {pipeline_mode = #tpu.pipeline_mode<synchronous>, transform_indices = @transform_2, window_bounds = array<i64: 1, 384>}, {pipeline_mode = #tpu.pipeline_mode<synchronous>, transform_indices = @transform_3, window_bounds = array<i64: 128, 128>}, {pipeline_mode = #tpu.pipeline_mode<synchronous>, transform_indices = @transform_4, window_bounds = array<i64: 1, 128>}, {transform_indices = @transform_5, window_bounds = array<i64: 2, 16, 128>}]} {
    %c0 = arith.constant 0 : index
    %c0_0 = arith.constant 0 : index
    %c0_1 = arith.constant 0 : index
    %0 = vector.load %arg1[%c0, %c0_0, %c0_1] : memref<2x16x128xf32, #tpu.memory_space<vmem>>, vector<2x16x128xf32>
    %1 = vector.shape_cast %0 : vector<2x16x128xf32> to vector<32x128xf32>
    %c0_2 = arith.constant 0 : index
    %c0_3 = arith.constant 0 : index
    %2 = vector.load %arg2[%c0_2, %c0_3] : memref<128x384xf32, #tpu.memory_space<vmem>>, vector<128x384xf32>
    %cst = arith.constant dense<0.000000e+00> : vector<32x384xf32>
    %3 = tpu.matmul %1, %2, %cst {dimension_numbers = #tpu.dot_dimension_numbers<[1], [0], [0], [1], [0, 0, 1, 1], [], []>} : vector<32x128xf32>, vector<128x384xf32>, vector<32x384xf32> -> vector<32x384xf32>
    %c0_4 = arith.constant 0 : index
    %c0_5 = arith.constant 0 : index
    %4 = vector.load %arg3[%c0_4, %c0_5] : memref<1x384xf32, #tpu.memory_space<vmem>>, vector<1x384xf32>
    %5 = vector.broadcast %4 : vector<1x384xf32> to vector<32x384xf32>
    %6 = arith.addf %3, %5 : vector<32x384xf32>
    %7 = vector.shape_cast %6 : vector<32x384xf32> to vector<2x16x384xf32>
    %8 = vector.extract_strided_slice %7 {offsets = [0, 0, 0], sizes = [2, 16, 32], strides = [1, 1, 1]} : vector<2x16x384xf32> to vector<2x16x32xf32>
    %9 = vector.extract_strided_slice %7 {offsets = [0, 0, 128], sizes = [2, 16, 32], strides = [1, 1, 1]} : vector<2x16x384xf32> to vector<2x16x32xf32>
    %10 = vector.extract_strided_slice %7 {offsets = [0, 0, 256], sizes = [2, 16, 32], strides = [1, 1, 1]} : vector<2x16x384xf32> to vector<2x16x32xf32>
    "tpu.trace_start"() <{level = 10 : i32, message = "bqd,bkd->bqk"}> : () -> ()
    %cst_6 = arith.constant dense<0.000000e+00> : vector<2x16x16xf32>
    %11 = tpu.matmul %8, %9, %cst_6 {dimension_numbers = #tpu.dot_dimension_numbers<[2], [2], [1], [1], [0, 0, 0, 1, 1, 1], [0], [0]>} : vector<2x16x32xf32>, vector<2x16x32xf32>, vector<2x16x16xf32> -> vector<2x16x16xf32>
    "tpu.trace_stop"() : () -> ()
    %cst_7 = arith.constant dense<0xFF800000> : vector<2x16xf32>
    %12 = vector.multi_reduction <maximumf>, %11, %cst_7 [2] : vector<2x16x16xf32> to vector<2x16xf32>
    %13 = vector.shape_cast %12 : vector<2x16xf32> to vector<2x16x1xf32>
    %14 = vector.broadcast %13 : vector<2x16x1xf32> to vector<2x16x16xf32>
    %15 = arith.subf %11, %14 : vector<2x16x16xf32>
    %16 = math.exp %15 : vector<2x16x16xf32>
    %cst_8 = arith.constant dense<0.000000e+00> : vector<2x16xf32>
    %17 = vector.multi_reduction <add>, %16, %cst_8 [2] : vector<2x16x16xf32> to vector<2x16xf32>
    %18 = vector.shape_cast %17 : vector<2x16xf32> to vector<2x16x1xf32>
    %19 = tpu.reciprocal %18 {approx = true} : vector<2x16x1xf32> -> vector<2x16x1xf32>
    %20 = vector.broadcast %19 : vector<2x16x1xf32> to vector<2x16x16xf32>
    %21 = arith.mulf %16, %20 : vector<2x16x16xf32>
    "tpu.trace_start"() <{level = 10 : i32, message = "bqk,bkd->bqd"}> : () -> ()
    %cst_9 = arith.constant dense<0.000000e+00> : vector<2x16x32xf32>
    %22 = tpu.matmul %21, %10, %cst_9 {dimension_numbers = #tpu.dot_dimension_numbers<[2], [1], [1], [2], [0, 0, 0, 1, 1, 2], [0], [0]>} : vector<2x16x16xf32>, vector<2x16x32xf32>, vector<2x16x32xf32> -> vector<2x16x32xf32>
    "tpu.trace_stop"() : () -> ()
    %23 = vector.extract_strided_slice %7 {offsets = [0, 0, 32], sizes = [2, 16, 32], strides = [1, 1, 1]} : vector<2x16x384xf32> to vector<2x16x32xf32>
    %24 = vector.extract_strided_slice %7 {offsets = [0, 0, 160], sizes = [2, 16, 32], strides = [1, 1, 1]} : vector<2x16x384xf32> to vector<2x16x32xf32>
    %25 = vector.extract_strided_slice %7 {offsets = [0, 0, 288], sizes = [2, 16, 32], strides = [1, 1, 1]} : vector<2x16x384xf32> to vector<2x16x32xf32>
    "tpu.trace_start"() <{level = 10 : i32, message = "bqd,bkd->bqk"}> : () -> ()
    %cst_10 = arith.constant dense<0.000000e+00> : vector<2x16x16xf32>
    %26 = tpu.matmul %23, %24, %cst_10 {dimension_numbers = #tpu.dot_dimension_numbers<[2], [2], [1], [1], [0, 0, 0, 1, 1, 1], [0], [0]>} : vector<2x16x32xf32>, vector<2x16x32xf32>, vector<2x16x16xf32> -> vector<2x16x16xf32>
    "tpu.trace_stop"() : () -> ()
    %cst_11 = arith.constant dense<0xFF800000> : vector<2x16xf32>
    %27 = vector.multi_reduction <maximumf>, %26, %cst_11 [2] : vector<2x16x16xf32> to vector<2x16xf32>
    %28 = vector.shape_cast %27 : vector<2x16xf32> to vector<2x16x1xf32>
    %29 = vector.broadcast %28 : vector<2x16x1xf32> to vector<2x16x16xf32>
    %30 = arith.subf %26, %29 : vector<2x16x16xf32>
    %31 = math.exp %30 : vector<2x16x16xf32>
    %cst_12 = arith.constant dense<0.000000e+00> : vector<2x16xf32>
    %32 = vector.multi_reduction <add>, %31, %cst_12 [2] : vector<2x16x16xf32> to vector<2x16xf32>
    %33 = vector.shape_cast %32 : vector<2x16xf32> to vector<2x16x1xf32>
    %34 = tpu.reciprocal %33 {approx = true} : vector<2x16x1xf32> -> vector<2x16x1xf32>
    %35 = vector.broadcast %34 : vector<2x16x1xf32> to vector<2x16x16xf32>
    %36 = arith.mulf %31, %35 : vector<2x16x16xf32>
    "tpu.trace_start"() <{level = 10 : i32, message = "bqk,bkd->bqd"}> : () -> ()
    %cst_13 = arith.constant dense<0.000000e+00> : vector<2x16x32xf32>
    %37 = tpu.matmul %36, %25, %cst_13 {dimension_numbers = #tpu.dot_dimension_numbers<[2], [1], [1], [2], [0, 0, 0, 1, 1, 2], [0], [0]>} : vector<2x16x16xf32>, vector<2x16x32xf32>, vector<2x16x32xf32> -> vector<2x16x32xf32>
    "tpu.trace_stop"() : () -> ()
    %38 = vector.extract_strided_slice %7 {offsets = [0, 0, 64], sizes = [2, 16, 32], strides = [1, 1, 1]} : vector<2x16x384xf32> to vector<2x16x32xf32>
    %39 = vector.extract_strided_slice %7 {offsets = [0, 0, 192], sizes = [2, 16, 32], strides = [1, 1, 1]} : vector<2x16x384xf32> to vector<2x16x32xf32>
    %40 = vector.extract_strided_slice %7 {offsets = [0, 0, 320], sizes = [2, 16, 32], strides = [1, 1, 1]} : vector<2x16x384xf32> to vector<2x16x32xf32>
    "tpu.trace_start"() <{level = 10 : i32, message = "bqd,bkd->bqk"}> : () -> ()
    %cst_14 = arith.constant dense<0.000000e+00> : vector<2x16x16xf32>
    %41 = tpu.matmul %38, %39, %cst_14 {dimension_numbers = #tpu.dot_dimension_numbers<[2], [2], [1], [1], [0, 0, 0, 1, 1, 1], [0], [0]>} : vector<2x16x32xf32>, vector<2x16x32xf32>, vector<2x16x16xf32> -> vector<2x16x16xf32>
    "tpu.trace_stop"() : () -> ()
    %cst_15 = arith.constant dense<0xFF800000> : vector<2x16xf32>
    %42 = vector.multi_reduction <maximumf>, %41, %cst_15 [2] : vector<2x16x16xf32> to vector<2x16xf32>
    %43 = vector.shape_cast %42 : vector<2x16xf32> to vector<2x16x1xf32>
    %44 = vector.broadcast %43 : vector<2x16x1xf32> to vector<2x16x16xf32>
    %45 = arith.subf %41, %44 : vector<2x16x16xf32>
    %46 = math.exp %45 : vector<2x16x16xf32>
    %cst_16 = arith.constant dense<0.000000e+00> : vector<2x16xf32>
    %47 = vector.multi_reduction <add>, %46, %cst_16 [2] : vector<2x16x16xf32> to vector<2x16xf32>
    %48 = vector.shape_cast %47 : vector<2x16xf32> to vector<2x16x1xf32>
    %49 = tpu.reciprocal %48 {approx = true} : vector<2x16x1xf32> -> vector<2x16x1xf32>
    %50 = vector.broadcast %49 : vector<2x16x1xf32> to vector<2x16x16xf32>
    %51 = arith.mulf %46, %50 : vector<2x16x16xf32>
    "tpu.trace_start"() <{level = 10 : i32, message = "bqk,bkd->bqd"}> : () -> ()
    %cst_17 = arith.constant dense<0.000000e+00> : vector<2x16x32xf32>
    %52 = tpu.matmul %51, %40, %cst_17 {dimension_numbers = #tpu.dot_dimension_numbers<[2], [1], [1], [2], [0, 0, 0, 1, 1, 2], [0], [0]>} : vector<2x16x16xf32>, vector<2x16x32xf32>, vector<2x16x32xf32> -> vector<2x16x32xf32>
    "tpu.trace_stop"() : () -> ()
    %53 = vector.extract_strided_slice %7 {offsets = [0, 0, 96], sizes = [2, 16, 32], strides = [1, 1, 1]} : vector<2x16x384xf32> to vector<2x16x32xf32>
    %54 = vector.extract_strided_slice %7 {offsets = [0, 0, 224], sizes = [2, 16, 32], strides = [1, 1, 1]} : vector<2x16x384xf32> to vector<2x16x32xf32>
    %55 = vector.extract_strided_slice %7 {offsets = [0, 0, 352], sizes = [2, 16, 32], strides = [1, 1, 1]} : vector<2x16x384xf32> to vector<2x16x32xf32>
    "tpu.trace_start"() <{level = 10 : i32, message = "bqd,bkd->bqk"}> : () -> ()
    %cst_18 = arith.constant dense<0.000000e+00> : vector<2x16x16xf32>
    %56 = tpu.matmul %53, %54, %cst_18 {dimension_numbers = #tpu.dot_dimension_numbers<[2], [2], [1], [1], [0, 0, 0, 1, 1, 1], [0], [0]>} : vector<2x16x32xf32>, vector<2x16x32xf32>, vector<2x16x16xf32> -> vector<2x16x16xf32>
    "tpu.trace_stop"() : () -> ()
    %cst_19 = arith.constant dense<0xFF800000> : vector<2x16xf32>
    %57 = vector.multi_reduction <maximumf>, %56, %cst_19 [2] : vector<2x16x16xf32> to vector<2x16xf32>
    %58 = vector.shape_cast %57 : vector<2x16xf32> to vector<2x16x1xf32>
    %59 = vector.broadcast %58 : vector<2x16x1xf32> to vector<2x16x16xf32>
    %60 = arith.subf %56, %59 : vector<2x16x16xf32>
    %61 = math.exp %60 : vector<2x16x16xf32>
    %cst_20 = arith.constant dense<0.000000e+00> : vector<2x16xf32>
    %62 = vector.multi_reduction <add>, %61, %cst_20 [2] : vector<2x16x16xf32> to vector<2x16xf32>
    %63 = vector.shape_cast %62 : vector<2x16xf32> to vector<2x16x1xf32>
    %64 = tpu.reciprocal %63 {approx = true} : vector<2x16x1xf32> -> vector<2x16x1xf32>
    %65 = vector.broadcast %64 : vector<2x16x1xf32> to vector<2x16x16xf32>
    %66 = arith.mulf %61, %65 : vector<2x16x16xf32>
    "tpu.trace_start"() <{level = 10 : i32, message = "bqk,bkd->bqd"}> : () -> ()
    %cst_21 = arith.constant dense<0.000000e+00> : vector<2x16x32xf32>
    %67 = tpu.matmul %66, %55, %cst_21 {dimension_numbers = #tpu.dot_dimension_numbers<[2], [1], [1], [2], [0, 0, 0, 1, 1, 2], [0], [0]>} : vector<2x16x16xf32>, vector<2x16x32xf32>, vector<2x16x32xf32> -> vector<2x16x32xf32>
    "tpu.trace_stop"() : () -> ()
    %68 = tpu.concatenate %22, %37, %52, %67 in 2 : vector<2x16x32xf32>, vector<2x16x32xf32>, vector<2x16x32xf32>, vector<2x16x32xf32> -> vector<2x16x128xf32>
    %69 = vector.shape_cast %68 : vector<2x16x128xf32> to vector<32x128xf32>
    %c0_22 = arith.constant 0 : index
    %c0_23 = arith.constant 0 : index
    %70 = vector.load %arg4[%c0_22, %c0_23] : memref<128x128xf32, #tpu.memory_space<vmem>>, vector<128x128xf32>
    %cst_24 = arith.constant dense<0.000000e+00> : vector<32x128xf32>
    %71 = tpu.matmul %69, %70, %cst_24 {dimension_numbers = #tpu.dot_dimension_numbers<[1], [0], [0], [1], [0, 0, 1, 1], [], []>} : vector<32x128xf32>, vector<128x128xf32>, vector<32x128xf32> -> vector<32x128xf32>
    %c0_25 = arith.constant 0 : index
    %c0_26 = arith.constant 0 : index
    %72 = vector.load %arg5[%c0_25, %c0_26] : memref<1x128xf32, #tpu.memory_space<vmem>>, vector<1x128xf32>
    %73 = vector.broadcast %72 : vector<1x128xf32> to vector<32x128xf32>
    %74 = arith.addf %71, %73 : vector<32x128xf32>
    %75 = vector.shape_cast %74 : vector<32x128xf32> to vector<2x16x128xf32>
    %c0_27 = arith.constant 0 : index
    %c0_28 = arith.constant 0 : index
    %c0_29 = arith.constant 0 : index
    %76 = vector.load %arg6[%c0_27, %c0_28, %c0_29] : memref<2x16x128xf32, #tpu.memory_space<vmem>>, vector<2x16x128xf32>
    tpu.vector_store %arg6[%c0_27, %c0_28, %c0_29], %75 {strides = array<i32>} : memref<2x16x128xf32, #tpu.memory_space<vmem>>, vector<2x16x128xf32>,
    return
  }
  func.func @transform_0(%arg0: i32) -> (i32, i32, i32) {
    %c0_i32 = arith.constant 0 : i32
    %c0_i32_0 = arith.constant 0 : i32
    %c0_i32_1 = arith.constant 0 : i32
    return %arg0, %c0_i32, %c0_i32_0 : i32, i32, i32
  }
  func.func @transform_1(%arg0: i32) -> (i32, i32) {
    %c0_i32 = arith.constant 0 : i32
    %c0_i32_0 = arith.constant 0 : i32
    %c0_i32_1 = arith.constant 0 : i32
    return %c0_i32, %c0_i32_0 : i32, i32
  }
  func.func @transform_2(%arg0: i32) -> (i32, i32) {
    %c0_i32 = arith.constant 0 : i32
    %c0_i32_0 = arith.constant 0 : i32
    %c0_i32_1 = arith.constant 0 : i32
    return %c0_i32, %c0_i32_0 : i32, i32
  }
  func.func @transform_3(%arg0: i32) -> (i32, i32) {
    %c0_i32 = arith.constant 0 : i32
    %c0_i32_0 = arith.constant 0 : i32
    %c0_i32_1 = arith.constant 0 : i32
    return %c0_i32, %c0_i32_0 : i32, i32
  }
  func.func @transform_4(%arg0: i32) -> (i32, i32) {
    %c0_i32 = arith.constant 0 : i32
    %c0_i32_0 = arith.constant 0 : i32
    %c0_i32_1 = arith.constant 0 : i32
    return %c0_i32, %c0_i32_0 : i32, i32
  }
  func.func @transform_5(%arg0: i32) -> (i32, i32, i32) {
    %c0_i32 = arith.constant 0 : i32
    %c0_i32_0 = arith.constant 0 : i32
    %c0_i32_1 = arith.constant 0 : i32
    return %arg0, %c0_i32, %c0_i32_0 : i32, i32, i32
  }
}

</mosaic_0001>

<llo_original>
// kernel: tpu_custom_call.1
$region0: #{tpu_custom_call.1}
  #allocation0 [shape = 'u32[]', space=smem, size = 0x4, offset = 0x4, fixed_abs, tag = 'smem constant byte address 0x4 - core index']
  #allocation1 [shape = 'u32[144,128]{1,0:T(1,128)}', space=vmem, size = 0x12000, scoped, tag = 'internal scratch']
  %s0 = inlined_call_operand.hbm [shape: f32[4,16,128], index: 0, kind: input, shape index: {}]
  %s1 = inlined_call_operand.hbm [shape: f32[128,384], index: 1, kind: input, shape index: {}]
  %s2 = inlined_call_operand.vmem [shape: f32[1,384], index: 2, kind: input, shape index: {}]
  %s3 = inlined_call_operand.hbm [shape: f32[128,128], index: 3, kind: input, shape index: {}]
  %s4 = inlined_call_operand.vmem [shape: f32[1,128], index: 4, kind: input, shape index: {}]
  %s5 = inlined_call_operand.hbm [shape: f32[4,16,128], index: 5, kind: output, shape index: {}]
  %s6 = sld [smem:[#allocation0]]
  $region65: #{tpu_custom_call.1} parent=0
    _
  %s8 = ssub.s32 1, %s6
  %s9 = scalar_select 0, %s8, %s6
  $region1: #{tpu_custom_call.1} parent=0
    #allocation2 [shape = 'u8[32768]{0}', space=vmem, size = 0x8000, scoped, tag = 'input window, operand 0']
    #allocation3 [shape = 's32[2]{0}', space=sflag, size = 0x8, scoped, tag = 'scoped memory for tpu_custom_call.1']
    #allocation4 [shape = 's32[2]{0}', space=sflag, size = 0x8, scoped, tag = 'scoped memory for tpu_custom_call.1']
    #allocation5 [shape = 'u8[196608]{0}', space=vmem, size = 0x30000, scoped, tag = 'input window, operand 1, single buffered']
    #allocation6 [shape = 's32[1]{0}', space=sflag, size = 0x4, scoped, tag = 'scoped memory for tpu_custom_call.1']
    #allocation7 [shape = 'u8[65536]{0}', space=vmem, size = 0x10000, scoped, tag = 'input window, operand 3, single buffered']
    #allocation8 [shape = 'u8[32768]{0}', space=vmem, size = 0x8000, scoped, tag = 'output window, operand 0']
    %10 = vsyncpa [#allocation3], 0
    %s11 = scalar_lea.sflag [#allocation3], 1
    %12 = vsyncpa %s11, 0
    %13 = vsyncpa [#allocation6], 0
    %14 = vsyncpa [#allocation4], 0
    %s15 = scalar_lea.sflag [#allocation4], 1
    %16 = vsyncpa %s15, 0
    loop: start=0, step=1, limit=4
    $region2: #{tpu_custom_call.1} parent=1 // loop_pre_header
      _
    $region3: #{tpu_custom_call.1} parent=1 // loop_header
      %s18 = sphi 0, %s22
      %p19 = scmp.ge.s32.totalorder %s18, 4
      %s28 = sphi 0, %s30
      %s31 = sphi 0, %s28
      %s32 = sphi 0, %s31
      %s48 = sphi 0, %s32
      %s52 = sphi 0, %s52
      %s54 = sphi 0, %s52
      %s55 = sphi 0, %s54
      %s69 = sphi 0, %s55
      %s73 = sphi 0, %s73
      %s75 = sphi 0, %s73
      %s76 = sphi 0, %s75
      %s90 = sphi 0, %s76
      %s94 = sphi 0, %s94
      %s96 = sphi 0, %s94
      %s97 = sphi 0, %s96
      %s111 = sphi 0, %s97
      %s115 = sphi 0, %s115
      %s117 = sphi 0, %s115
      %s118 = sphi 0, %s117
      %s132 = sphi 0, %s118
      %s138 = sphi 0, %s140
      %s141 = sphi 0, %s138
      %s142 = sphi 0, %s141
      %s158 = sphi 0, %s142
    $region4: #{tpu_custom_call.1} parent=1 // loop_header_branch
      %21 = sbr.rel (%p19) target = $region8
    $region5: #{tpu_custom_call.1} parent=1 // loop_body
      %s23 = ssub.s32 %s18, 1
      %s24 = ssub.s32 %s18, 2
      %s25 = sadd.s32 %s18, 1
      %s26 = ssub.s32 %s18, %s25
      %p27 = scmp.eq.s32.totalorder %s26, 0
      %s29 = sadd.s32 %s28, 1
      %s30 = scalar_select %p27, %s28, %s29
      %p33 = pneg %p27
      %p34 = scmp.eq.s32.totalorder %s18, 1
      %p35 = por %p33, %p34
      %p36 = scmp.ne.s32.totalorder %s28, %s31
      %p37 = scmp.eq.s32.totalorder %s18, 0
      %p38 = por %p36, %p37
      %p39 = scmp.ne.s32.totalorder %s28, %s31
      %p40 = scmp.eq.s32.totalorder %s23, 1
      %p41 = por %p39, %p40
      %p42 = scmp.ne.s32.totalorder %s31, %s32
      %p43 = scmp.eq.s32.totalorder %s23, 0
      %p44 = por %p42, %p43
      %p45 = scmp.ne.s32.totalorder %s31, %s32
      %p46 = scmp.eq.s32.totalorder %s24, 1
      %p47 = por %p45, %p46
      %p49 = scmp.ne.s32.totalorder %s32, %s48
      %p50 = scmp.eq.s32.totalorder %s24, 0
      %p51 = por %p49, %p50
      %s53 = sadd.s32 %s52, 1
      %p56 = scmp.eq.s32.totalorder %s18, 1
      %p57 = scmp.ne.s32.totalorder %s52, %s54
      %p58 = scmp.eq.s32.totalorder %s18, 0
      %p59 = por %p57, %p58
      %p60 = scmp.ne.s32.totalorder %s52, %s54
      %p61 = scmp.eq.s32.totalorder %s23, 1
      %p62 = por %p60, %p61
      %p63 = scmp.ne.s32.totalorder %s54, %s55
      %p64 = scmp.eq.s32.totalorder %s23, 0
      %p65 = por %p63, %p64
      %p66 = scmp.ne.s32.totalorder %s54, %s55
      %p67 = scmp.eq.s32.totalorder %s24, 1
      %p68 = por %p66, %p67
      %p70 = scmp.ne.s32.totalorder %s55, %s69
      %p71 = scmp.eq.s32.totalorder %s24, 0
      %p72 = por %p70, %p71
      %s74 = sadd.s32 %s73, 1
      %p77 = scmp.eq.s32.totalorder %s18, 1
      %p78 = scmp.ne.s32.totalorder %s73, %s75
      %p79 = scmp.eq.s32.totalorder %s18, 0
      %p80 = por %p78, %p79
      %p81 = scmp.ne.s32.totalorder %s73, %s75
      %p82 = scmp.eq.s32.totalorder %s23, 1
      %p83 = por %p81, %p82
      %p84 = scmp.ne.s32.totalorder %s75, %s76
      %p85 = scmp.eq.s32.totalorder %s23, 0
      %p86 = por %p84, %p85
      %p87 = scmp.ne.s32.totalorder %s75, %s76
      %p88 = scmp.eq.s32.totalorder %s24, 1
      %p89 = por %p87, %p88
      %p91 = scmp.ne.s32.totalorder %s76, %s90
      %p92 = scmp.eq.s32.totalorder %s24, 0
      %p93 = por %p91, %p92
      %s95 = sadd.s32 %s94, 1
      %p98 = scmp.eq.s32.totalorder %s18, 1
      %p99 = scmp.ne.s32.totalorder %s94, %s96
      %p100 = scmp.eq.s32.totalorder %s18, 0
      %p101 = por %p99, %p100
      %p102 = scmp.ne.s32.totalorder %s94, %s96
      %p103 = scmp.eq.s32.totalorder %s23, 1
      %p104 = por %p102, %p103
      %p105 = scmp.ne.s32.totalorder %s96, %s97
      %p106 = scmp.eq.s32.totalorder %s23, 0
      %p107 = por %p105, %p106
      %p108 = scmp.ne.s32.totalorder %s96, %s97
      %p109 = scmp.eq.s32.totalorder %s24, 1
      %p110 = por %p108, %p109
      %p112 = scmp.ne.s32.totalorder %s97, %s111
      %p113 = scmp.eq.s32.totalorder %s24, 0
      %p114 = por %p112, %p113
      %s116 = sadd.s32 %s115, 1
      %p119 = scmp.eq.s32.totalorder %s18, 1
      %p120 = scmp.ne.s32.totalorder %s115, %s117
      %p121 = scmp.eq.s32.totalorder %s18, 0
      %p122 = por %p120, %p121
      %p123 = scmp.ne.s32.totalorder %s115, %s117
      %p124 = scmp.eq.s32.totalorder %s23, 1
      %p125 = por %p123, %p124
      %p126 = scmp.ne.s32.totalorder %s117, %s118
      %p127 = scmp.eq.s32.totalorder %s23, 0
      %p128 = por %p126, %p127
      %p129 = scmp.ne.s32.totalorder %s117, %s118
      %p130 = scmp.eq.s32.totalorder %s24, 1
      %p131 = por %p129, %p130
      %p133 = scmp.ne.s32.totalorder %s118, %s132
      %p134 = scmp.eq.s32.totalorder %s24, 0
      %p135 = por %p133, %p134
      %s136 = ssub.s32 %s18, %s25
      %p137 = scmp.eq.s32.totalorder %s136, 0
      %s139 = sadd.s32 %s138, 1
      %s140 = scalar_select %p137, %s138, %s139
      %p143 = pneg %p137
      %p144 = scmp.eq.s32.totalorder %s18, 1
      %p145 = por %p143, %p144
      %p146 = scmp.ne.s32.totalorder %s138, %s141
      %p147 = scmp.eq.s32.totalorder %s18, 0
      %p148 = por %p146, %p147
      %p149 = scmp.ne.s32.totalorder %s138, %s141
      %p150 = scmp.eq.s32.totalorder %s23, 1
      %p151 = por %p149, %p150
      %p152 = scmp.ne.s32.totalorder %s141, %s142
      %p153 = scmp.eq.s32.totalorder %s23, 0
      %p154 = por %p152, %p153
      %p155 = scmp.ne.s32.totalorder %s141, %s142
      %p156 = scmp.eq.s32.totalorder %s24, 1
      %p157 = por %p155, %p156
      %p159 = scmp.ne.s32.totalorder %s142, %s158
      %p160 = scmp.eq.s32.totalorder %s24, 0
      %p161 = por %p159, %p160
      %p162 = scmp.le.s32.totalorder 1, %s18
      %p163 = scmp.lt.s32.totalorder %s18, 3
      %p164 = pnand %p162, %p163
      %p165 = pneg %p164
      // Predicated region
      $region9: #{tpu_custom_call.1} parent=5 // pred_check
        _
      $region10: #{tpu_custom_call.1} parent=5 // pred_check_branch
        %167 = sbr.rel (%p164) target = $region12
      $region11: #{tpu_custom_call.1} parent=5 // pred_region
        %s168 = ssub.s32 %s18, 1
        // Predicated region
        $region13: #{tpu_custom_call.1} parent=11 // pred_check
          %p169 = pneg %p65
        $region14: #{tpu_custom_call.1} parent=11 // pred_check_branch
          %171 = sbr.rel (%p169) target = $region16
        $region15: #{tpu_custom_call.1} parent=11 // pred_region
          %s173 = ssub.s32 6144, 6144
          %174 = vsyncadd [#allocation6], %s173
          %s175 = sshll.u32 [#allocation5], 4
          %s176 = int_to_ptr.vmem [resolvable:$true] %s175
          %181 = dma.hbm_to_vmem [thread:$0]  %s1, 6144, %s176, [#allocation6], 384, 384, 24
        $region16: #{tpu_custom_call.1} parent=11 // pred_fallthru
          _
        // Predicated region
        $region17: #{tpu_custom_call.1} parent=11 // pred_check
          %p182 = pneg %p86
        $region18: #{tpu_custom_call.1} parent=11 // pred_check_branch
          %184 = sbr.rel (%p182) target = $region20
        $region19: #{tpu_custom_call.1} parent=11 // pred_region
          _
        $region20: #{tpu_custom_call.1} parent=11 // pred_fallthru
          _
        // Predicated region
        $region21: #{tpu_custom_call.1} parent=11 // pred_check
          %p185 = pneg %p107
        $region22: #{tpu_custom_call.1} parent=11 // pred_check_branch
          %187 = sbr.rel (%p185) target = $region24
        $region23: #{tpu_custom_call.1} parent=11 // pred_region
          %s189 = ssub.s32 2048, 2048
          %190 = vsyncadd [#allocation6], %s189
          %s191 = sshll.u32 [#allocation7], 4
          %s192 = int_to_ptr.vmem [resolvable:$true] %s191
          %197 = dma.hbm_to_vmem [thread:$0]  %s3, 2048, %s192, [#allocation6], 128, 128, 8
        $region24: #{tpu_custom_call.1} parent=11 // pred_fallthru
          _
        // Predicated region
        $region25: #{tpu_custom_call.1} parent=11 // pred_check
          %p198 = pneg %p128
        $region26: #{tpu_custom_call.1} parent=11 // pred_check_branch
          %200 = sbr.rel (%p198) target = $region28
        $region27: #{tpu_custom_call.1} parent=11 // pred_region
          _
        $region28: #{tpu_custom_call.1} parent=11 // pred_fallthru
          _
      $region12: #{tpu_custom_call.1} parent=5 // pred_fallthru
        _
      %p201 = scmp.lt.s32.totalorder %s18, 2
      // Predicated region
      $region29: #{tpu_custom_call.1} parent=5 // pred_check
        %p202 = pneg %p201
      $region30: #{tpu_custom_call.1} parent=5 // pred_check_branch
        %204 = sbr.rel (%p202) target = $region32
      $region31: #{tpu_custom_call.1} parent=5 // pred_region
        // Predicated region
        $region33: #{tpu_custom_call.1} parent=31 // pred_check
          %p205 = pneg %p38
        $region34: #{tpu_custom_call.1} parent=31 // pred_check_branch
          %207 = sbr.rel (%p205) target = $region36
        $region35: #{tpu_custom_call.1} parent=31 // pred_region
          %s208 = sand.u32 %s28, 1
          %s209 = scalar_lea.sflag [#allocation3], %s208
          %s210 = sand.u32 %s28, 1
          %s211 = smul.addr %s210, 32
          %s212 = scalar_lea.vmem [#allocation2], %s211
          %s213 = smul.u32 2, %s18
          %s215 = ssub.s32 512, 512
          %216 = vsyncadd %s209, %s215
          %s217 = smul.addr %s213, 2
          %s218 = smul.addr %s217, 128
          %s219 = scalar_lea.hbm %s0, %s218
          %s220 = sshll.u32 %s212, 4
          %s221 = int_to_ptr.vmem [resolvable:$true] %s220
          %226 = dma.hbm_to_vmem [thread:$0]  %s219, 512, %s221, %s209, 128, 128, 8
        $region36: #{tpu_custom_call.1} parent=31 // pred_fallthru
          _
      $region32: #{tpu_custom_call.1} parent=5 // pred_fallthru
        _
      %p227 = scmp.le.s32.totalorder 1, %s18
      %p228 = scmp.lt.s32.totalorder %s18, 3
      %p229 = pnand %p227, %p228
      %p230 = pneg %p229
      // Predicated region
      $region37: #{tpu_custom_call.1} parent=5 // pred_check
        _
      $region38: #{tpu_custom_call.1} parent=5 // pred_check_branch
        %232 = sbr.rel (%p229) target = $region40
      $region39: #{tpu_custom_call.1} parent=5 // pred_region
        %s233 = ssub.s32 %s18, 1
        %s234 = sand.u32 %s31, 1
        %s235 = scalar_lea.sflag [#allocation3], %s234
        %s236 = sand.u32 %s31, 1
        %s237 = smul.addr %s236, 32
        %s238 = scalar_lea.vmem [#allocation2], %s237
        // Predicated region
        $region41: #{tpu_custom_call.1} parent=39 // pred_check
          %p239 = pneg %p44
        $region42: #{tpu_custom_call.1} parent=39 // pred_check_branch
          %241 = sbr.rel (%p239) target = $region44
        $region43: #{tpu_custom_call.1} parent=39 // pred_region
          %242 = dma.done %s235, 512
        $region44: #{tpu_custom_call.1} parent=39 // pred_fallthru
          _
        // Predicated region
        $region45: #{tpu_custom_call.1} parent=39 // pred_check
          %p243 = pneg %p65
        $region46: #{tpu_custom_call.1} parent=39 // pred_check_branch
          %245 = sbr.rel (%p243) target = $region48
        $region47: #{tpu_custom_call.1} parent=39 // pred_region
          %246 = dma.done [#allocation6], 6144
        $region48: #{tpu_custom_call.1} parent=39 // pred_fallthru
          _
        // Predicated region
        $region49: #{tpu_custom_call.1} parent=39 // pred_check
          %p247 = pneg %p107
        $region50: #{tpu_custom_call.1} parent=39 // pred_check_branch
          %249 = sbr.rel (%p247) target = $region52
        $region51: #{tpu_custom_call.1} parent=39 // pred_region
          %250 = dma.done [#allocation6], 2048
        $region52: #{tpu_custom_call.1} parent=39 // pred_fallthru
          _
        %s251 = sand.u32 %s31, 1
        %s252 = scalar_lea.sflag [#allocation3], %s251
        %s253 = sand.u32 %s31, 1
        %s254 = smul.addr %s253, 32
        %s255 = scalar_lea.vmem [#allocation2], %s254
        %p256 = pneg %p44
        %p257 = pneg %p41
        %p258 = pneg %p65
        %p259 = pneg %p62
        %p260 = pneg %p86
        %p261 = pneg %p83
        %p262 = pneg %p107
        %p263 = pneg %p104
        %p264 = pneg %p128
        %p265 = pneg %p125
        %p266 = pneg %p154
        %p267 = pneg %p151
        %s268 = sand.u32 %s141, 1
        %s269 = scalar_lea.sflag [#allocation4], %s268
        %s270 = sand.u32 %s141, 1
        %s271 = smul.addr %s270, 32
        %s272 = scalar_lea.vmem [#allocation8], %s271
        %s273 = smul.u32 2, %s23
        %s274 = smul.u32 2, %s23
        %v275 = vld [vmem:[%s238] sm:$0xff]
        %v276 = vld [vmem:[%s238 + $0x8] sm:$0xff]
        %v277 = vld [vmem:[%s238 + $0x10] sm:$0xff]
        %v278 = vld [vmem:[%s238 + $0x18] sm:$0xff]
        %v279 = vld [vmem:[#allocation5] sm:$0xff]
        %v280 = vld [vmem:[#allocation5 + $0x8] sm:$0xff]
        %v281 = vld [vmem:[#allocation5 + $0x10] sm:$0xff]
        %v282 = vld [vmem:[#allocation5 + $0x18] sm:$0xff]
        %v283 = vld [vmem:[#allocation5 + $0x20] sm:$0xff]
        %v284 = vld [vmem:[#allocation5 + $0x28] sm:$0xff]
        %v285 = vld [vmem:[#allocation5 + $0x30] sm:$0xff]
        %v286 = vld [vmem:[#allocation5 + $0x38] sm:$0xff]
        %v287 = vld [vmem:[#allocation5 + $0x40] sm:$0xff]
        %v288 = vld [vmem:[#allocation5 + $0x48] sm:$0xff]
        %v289 = vld [vmem:[#allocation5 + $0x50] sm:$0xff]
        %v290 = vld [vmem:[#allocation5 + $0x58] sm:$0xff]
        %v291 = vld [vmem:[#allocation5 + $0x60] sm:$0xff]
        %v292 = vld [vmem:[#allocation5 + $0x68] sm:$0xff]
        %v293 = vld [vmem:[#allocation5 + $0x70] sm:$0xff]
        %v294 = vld [vmem:[#allocation5 + $0x78] sm:$0xff]
        %v295 = vld [vmem:[#allocation5 + $0x80] sm:$0xff]
        %v296 = vld [vmem:[#allocation5 + $0x88] sm:$0xff]
        %v297 = vld [vmem:[#allocation5 + $0x90] sm:$0xff]
        %v298 = vld [vmem:[#allocation5 + $0x98] sm:$0xff]
        %v299 = vld [vmem:[#allocation5 + $0xa0] sm:$0xff]
        %v300 = vld [vmem:[#allocation5 + $0xa8] sm:$0xff]
        %v301 = vld [vmem:[#allocation5 + $0xb0] sm:$0xff]
        %v302 = vld [vmem:[#allocation5 + $0xb8] sm:$0xff]
        %v303 = vld [vmem:[#allocation5 + $0xc0] sm:$0xff]
        %v304 = vld [vmem:[#allocation5 + $0xc8] sm:$0xff]
        %v305 = vld [vmem:[#allocation5 + $0xd0] sm:$0xff]
        %v306 = vld [vmem:[#allocation5 + $0xd8] sm:$0xff]
        %v307 = vld [vmem:[#allocation5 + $0xe0] sm:$0xff]
        %v308 = vld [vmem:[#allocation5 + $0xe8] sm:$0xff]
        %v309 = vld [vmem:[#allocation5 + $0xf0] sm:$0xff]
        %v310 = vld [vmem:[#allocation5 + $0xf8] sm:$0xff]
        %v311 = vld [vmem:[#allocation5 + $0x100] sm:$0xff]
        %v312 = vld [vmem:[#allocation5 + $0x108] sm:$0xff]
        %v313 = vld [vmem:[#allocation5 + $0x110] sm:$0xff]
        %v314 = vld [vmem:[#allocation5 + $0x118] sm:$0xff]
        %v315 = vld [vmem:[#allocation5 + $0x120] sm:$0xff]
        %v316 = vld [vmem:[#allocation5 + $0x128] sm:$0xff]
        %v317 = vld [vmem:[#allocation5 + $0x130] sm:$0xff]
        %v318 = vld [vmem:[#allocation5 + $0x138] sm:$0xff]
        %v319 = vld [vmem:[#allocation5 + $0x140] sm:$0xff]
        %v320 = vld [vmem:[#allocation5 + $0x148] sm:$0xff]
        %v321 = vld [vmem:[#allocation5 + $0x150] sm:$0xff]
        %v322 = vld [vmem:[#allocation5 + $0x158] sm:$0xff]
        %v323 = vld [vmem:[#allocation5 + $0x160] sm:$0xff]
        %v324 = vld [vmem:[#allocation5 + $0x168] sm:$0xff]
        %v325 = vld [vmem:[#allocation5 + $0x170] sm:$0xff]
        %v326 = vld [vmem:[#allocation5 + $0x178] sm:$0xff]
        %v327 = vld [vmem:[%s2] sm:$0x7]
        %v329 = vlaneseq
        %v330 = vshrl.u32 %v329, 7
        %v331 = vsub.s32 0, %v330
        %v332 = vrot.slane %v327, %v331
        %v333 = vlaneseq
        %v334 = vshrl.u32 %v333, 7
        %v335 = vsub.s32 1, %v334
        %v336 = vrot.slane %v327, %v335
        %v337 = vlaneseq
        %v338 = vshrl.u32 %v337, 7
        %v339 = vsub.s32 2, %v338
        %v340 = vrot.slane %v327, %v339
        %344 = vmatprep.subr.mxu0 %v280
        %345 = vmatpush1.msra.mxu0 %v279
        %346 = vmatprep.subr.mxu0 %v283
        %347 = vmatpush1.msra.mxu0 %v282
        %348 = vmatprep.subr.mxu0 %v286
        %349 = vmatpush1.msra.mxu0 %v285
        %350 = vmatprep.subr.mxu0 %v289
        %351 = vmatpush1.msra.mxu0 %v288
        %352 = vmatprep.subr.mxu0 %v292
        %353 = vmatpush1.msra.mxu0 %v291
        %354 = vmatprep.subr.mxu0 %v295
        %355 = vmatpush1.msra.mxu0 %v294
        %356 = vmatprep.subr.mxu0 %v298
        %357 = vmatpush1.msra.mxu0 %v297
        %358 = vmatprep.subr.mxu0 %v301
        %359 = vmatpush1.msra.mxu0 %v300
        %360 = vmatprep.subr.mxu0 %v304
        %361 = vmatpush1.msra.mxu0 %v303
        %362 = vmatprep.subr.mxu0 %v307
        %363 = vmatpush1.msra.mxu0 %v306
        %364 = vmatprep.subr.mxu0 %v310
        %365 = vmatpush1.msra.mxu0 %v309
        %366 = vmatprep.subr.mxu0 %v313
        %367 = vmatpush1.msra.mxu0 %v312
        %368 = vmatprep.subr.mxu0 %v316
        %369 = vmatpush1.msra.mxu0 %v315
        %370 = vmatprep.subr.mxu0 %v319
        %371 = vmatpush1.msra.mxu0 %v318
        %372 = vmatprep.subr.mxu0 %v322
        %373 = vmatpush1.msra.mxu0 %v321
        %374 = vmatprep.subr.mxu0 %v325
        %375 = vmatpush1.msra.mxu0 %v324
        %376 = vmatprep.subr.mxu0 0.0
        %377 = vmatpush1.msra.mxu0 0.0
        %378 = vmatprep.subr.mxu0 0.0
        %379 = vmatpush1.msra.mxu0 0.0
        %380 = vmatprep.subr.mxu0 0.0
        %381 = vmatpush1.msra.mxu0 0.0
        %382 = vmatprep.subr.mxu0 0.0
        %383 = vmatpush1.msra.mxu0 0.0
        %384 = vmatprep.subr.mxu0 0.0
        %385 = vmatpush1.msra.mxu0 0.0
        %386 = vmatprep.subr.mxu0 0.0
        %387 = vmatpush1.msra.mxu0 0.0
        %388 = vmatprep.subr.mxu0 0.0
        %389 = vmatpush1.msra.mxu0 0.0
        %390 = vmatprep.subr.mxu0 0.0
        %391 = vmatpush1.msra.mxu0 0.0
        %392 = vmatprep.subr.mxu0 0.0
        %393 = vmatpush1.msra.mxu0 0.0
        %394 = vmatprep.subr.mxu0 0.0
        %395 = vmatpush1.msra.mxu0 0.0
        %396 = vmatprep.subr.mxu0 0.0
        %397 = vmatpush1.msra.mxu0 0.0
        %398 = vmatprep.subr.mxu0 0.0
        %399 = vmatpush1.msra.mxu0 0.0
        %400 = vmatprep.subr.mxu0 0.0
        %401 = vmatpush1.msra.mxu0 0.0
        %402 = vmatprep.subr.mxu0 0.0
        %403 = vmatpush1.msra.mxu0 0.0
        %404 = vmatprep.subr.mxu0 0.0
        %405 = vmatpush1.msra.mxu0 0.0
        %406 = vmatprep.subr.mxu0 0.0
        %407 = vmatpush1.msra.mxu0 0.0
        %408 = vmatprep.mubr.f32.mxu0 0.0
        %409 = vmatmul.mubr.f32.gmra.mrb[0].mxu0 %v275
        %v410 = vpop.f32.mrb[0].mxu0
        %v411 = vadd.f32 %v332, %v410
        %v412 = vpop.f32.mrb[0].mxu0
        %v413 = vadd.f32 %v336, %v412
        %414 = vmatprep.mubr.f32.mxu0 0.0
        %415 = vmatmul.mubr.f32.gmra.mrb[0].mxu0 %v276
        %v416 = vpop.f32.mrb[0].mxu0
        %v417 = vadd.f32 %v332, %v416
        %v418 = vpop.f32.mrb[0].mxu0
        %v419 = vadd.f32 %v336, %v418
        %420 = vmatprep.mubr.f32.mxu0 0.0
        %421 = vmatmul.mubr.f32.gmra.mrb[0].mxu0 %v277
        %v422 = vpop.f32.mrb[0].mxu0
        %v423 = vadd.f32 %v332, %v422
        %v424 = vpop.f32.mrb[0].mxu0
        %v425 = vadd.f32 %v336, %v424
        %426 = vmatprep.mubr.f32.mxu0 0.0
        %427 = vmatmul.mubr.f32.gmra.mrb[0].mxu0 %v278
        %v428 = vpop.f32.mrb[0].mxu0
        %v429 = vadd.f32 %v332, %v428
        %v430 = vpop.f32.mrb[0].mxu0
        %v431 = vadd.f32 %v336, %v430
        %432 = vdwg.mxu0
        %433 = vmatprep.subr.mxu0 0.0
        %434 = vmatpush1.msra.mxu0 %v281
        %435 = vmatprep.subr.mxu0 0.0
        %436 = vmatpush1.msra.mxu0 %v284
        %437 = vmatprep.subr.mxu0 0.0
        %438 = vmatpush1.msra.mxu0 %v287
        %439 = vmatprep.subr.mxu0 0.0
        %440 = vmatpush1.msra.mxu0 %v290
        %441 = vmatprep.subr.mxu0 0.0
        %442 = vmatpush1.msra.mxu0 %v293
        %443 = vmatprep.subr.mxu0 0.0
        %444 = vmatpush1.msra.mxu0 %v296
        %445 = vmatprep.subr.mxu0 0.0
        %446 = vmatpush1.msra.mxu0 %v299
        %447 = vmatprep.subr.mxu0 0.0
        %448 = vmatpush1.msra.mxu0 %v302
        %449 = vmatprep.subr.mxu0 0.0
        %450 = vmatpush1.msra.mxu0 %v305
        %451 = vmatprep.subr.mxu0 0.0
        %452 = vmatpush1.msra.mxu0 %v308
        %453 = vmatprep.subr.mxu0 0.0
        %454 = vmatpush1.msra.mxu0 %v311
        %455 = vmatprep.subr.mxu0 0.0
        %456 = vmatpush1.msra.mxu0 %v314
        %457 = vmatprep.subr.mxu0 0.0
        %458 = vmatpush1.msra.mxu0 %v317
        %459 = vmatprep.subr.mxu0 0.0
        %460 = vmatpush1.msra.mxu0 %v320
        %461 = vmatprep.subr.mxu0 0.0
        %462 = vmatpush1.msra.mxu0 %v323
        %463 = vmatprep.subr.mxu0 0.0
        %464 = vmatpush1.msra.mxu0 %v326
        %465 = vmatprep.subr.mxu0 0.0
        %466 = vmatpush1.msra.mxu0 0.0
        %467 = vmatprep.subr.mxu0 0.0
        %468 = vmatpush1.msra.mxu0 0.0
        %469 = vmatprep.subr.mxu0 0.0
        %470 = vmatpush1.msra.mxu0 0.0
        %471 = vmatprep.subr.mxu0 0.0
        %472 = vmatpush1.msra.mxu0 0.0
        %473 = vmatprep.subr.mxu0 0.0
        %474 = vmatpush1.msra.mxu0 0.0
        %475 = vmatprep.subr.mxu0 0.0
        %476 = vmatpush1.msra.mxu0 0.0
        %477 = vmatprep.subr.mxu0 0.0
        %478 = vmatpush1.msra.mxu0 0.0
        %479 = vmatprep.subr.mxu0 0.0
        %480 = vmatpush1.msra.mxu0 0.0
        %481 = vmatprep.subr.mxu0 0.0
        %482 = vmatpush1.msra.mxu0 0.0
        %483 = vmatprep.subr.mxu0 0.0
        %484 = vmatpush1.msra.mxu0 0.0
        %485 = vmatprep.subr.mxu0 0.0
        %486 = vmatpush1.msra.mxu0 0.0
        %487 = vmatprep.subr.mxu0 0.0
        %488 = vmatpush1.msra.mxu0 0.0
        %489 = vmatprep.subr.mxu0 0.0
        %490 = vmatpush1.msra.mxu0 0.0
        %491 = vmatprep.subr.mxu0 0.0
        %492 = vmatpush1.msra.mxu0 0.0
        %493 = vmatprep.subr.mxu0 0.0
        %494 = vmatpush1.msra.mxu0 0.0
        %495 = vmatprep.subr.mxu0 0.0
        %496 = vmatpush1.msra.mxu0 0.0
        %497 = vmatprep.mubr.f32.mxu0 0.0
        %498 = vmatmul.mubr.f32.gmra.mrb[0].mxu0 %v275
        %v499 = vpop.f32.mrb[0].mxu0
        %v500 = vadd.f32 %v340, %v499
        %v501 = vpop.f32.mrb[0].mxu0
        %502 = vmatprep.mubr.f32.mxu0 0.0
        %503 = vmatmul.mubr.f32.gmra.mrb[0].mxu0 %v276
        %v504 = vpop.f32.mrb[0].mxu0
        %v505 = vadd.f32 %v340, %v504
        %v506 = vpop.f32.mrb[0].mxu0
        %507 = vmatprep.mubr.f32.mxu0 0.0
        %508 = vmatmul.mubr.f32.gmra.mrb[0].mxu0 %v277
        %v509 = vpop.f32.mrb[0].mxu0
        %v510 = vadd.f32 %v340, %v509
        %v511 = vpop.f32.mrb[0].mxu0
        %512 = vmatprep.mubr.f32.mxu0 0.0
        %513 = vmatmul.mubr.f32.gmra.mrb[0].mxu0 %v278
        %v514 = vpop.f32.mrb[0].mxu0
        %v515 = vadd.f32 %v340, %v514
        %v516 = vpop.f32.mrb[0].mxu0
        %517 = vdwg.mxu0
        %vm518 = vcmask 261120
        %v520 = vsel %vm518, %v411, 0
        %v523 = vsel %vm518, %v417, 0
        %v526 = vsel %vm518, %v413, 0
        %v529 = vsel %vm518, %v419, 0
        %531 = vmatprep.subr.mxu0 0.0
        %532 = vmatpush1.xpose.msra.mxu0 %v526
        %533 = vmatprep.subr.mxu0 0.0
        %534 = vmatpush1.xpose.msra.mxu0 %v529
        %535 = vmatprep.subr.mxu0 0.0
        %536 = vmatpush1.xpose.msra.mxu0 0.0
        %537 = vmatprep.subr.mxu0 0.0
        %538 = vmatpush1.xpose.msra.mxu0 0.0
        %539 = vmatprep.subr.mxu0 0.0
        %540 = vmatpush1.xpose.msra.mxu0 0.0
        %541 = vmatprep.subr.mxu0 0.0
        %542 = vmatpush1.xpose.msra.mxu0 0.0
        %543 = vmatprep.subr.mxu0 0.0
        %544 = vmatpush1.xpose.msra.mxu0 0.0
        %545 = vmatprep.subr.mxu0 0.0
        %546 = vmatpush1.xpose.msra.mxu0 0.0
        %547 = vmatprep.subr.mxu0 0.0
        %548 = vmatpush1.xpose.msra.mxu0 0.0
        %549 = vmatprep.subr.mxu0 0.0
        %550 = vmatpush1.xpose.msra.mxu0 0.0
        %551 = vmatprep.subr.mxu0 0.0
        %552 = vmatpush1.xpose.msra.mxu0 0.0
        %553 = vmatprep.subr.mxu0 0.0
        %554 = vmatpush1.xpose.msra.mxu0 0.0
        %555 = vmatprep.subr.mxu0 0.0
        %556 = vmatpush1.xpose.msra.mxu0 0.0
        %557 = vmatprep.subr.mxu0 0.0
        %558 = vmatpush1.xpose.msra.mxu0 0.0
        %559 = vmatprep.subr.mxu0 0.0
        %560 = vmatpush1.xpose.msra.mxu0 0.0
        %561 = vmatprep.subr.mxu0 0.0
        %562 = vmatpush1.xpose.msra.mxu0 0.0
        %563 = vmatprep.subr.mxu0 0.0
        %564 = vmatpush1.xpose.msra.mxu0 0.0
        %565 = vmatprep.subr.mxu0 0.0
        %566 = vmatpush1.xpose.msra.mxu0 0.0
        %567 = vmatprep.subr.mxu0 0.0
        %568 = vmatpush1.xpose.msra.mxu0 0.0
        %569 = vmatprep.subr.mxu0 0.0
        %570 = vmatpush1.xpose.msra.mxu0 0.0
        %571 = vmatprep.subr.mxu0 0.0
        %572 = vmatpush1.xpose.msra.mxu0 0.0
        %573 = vmatprep.subr.mxu0 0.0
        %574 = vmatpush1.xpose.msra.mxu0 0.0
        %575 = vmatprep.subr.mxu0 0.0
        %576 = vmatpush1.xpose.msra.mxu0 0.0
        %577 = vmatprep.subr.mxu0 0.0
        %578 = vmatpush1.xpose.msra.mxu0 0.0
        %579 = vmatprep.subr.mxu0 0.0
        %580 = vmatpush1.xpose.msra.mxu0 0.0
        %581 = vmatprep.subr.mxu0 0.0
        %582 = vmatpush1.xpose.msra.mxu0 0.0
        %583 = vmatprep.subr.mxu0 0.0
        %584 = vmatpush1.xpose.msra.mxu0 0.0
        %585 = vmatprep.subr.mxu0 0.0
        %586 = vmatpush1.xpose.msra.mxu0 0.0
        %587 = vmatprep.subr.mxu0 0.0
        %588 = vmatpush1.xpose.msra.mxu0 0.0
        %589 = vmatprep.subr.mxu0 0.0
        %590 = vmatpush1.xpose.msra.mxu0 0.0
        %591 = vmatprep.subr.mxu0 0.0
        %592 = vmatpush1.xpose.msra.mxu0 0.0
        %593 = vmatprep.subr.mxu0 0.0
        %594 = vmatpush1.xpose.msra.mxu0 0.0
        %595 = vmatprep.mubr.f32.mxu0 0.0
        %596 = vmatmul.mubr.f32.gmra.mrb[0].mxu0 %v520
        %v597 = vpop.f32.mrb[0].mxu0
        %v598 = vadd.f32 0.0, %v597
        %v599 = vpop.f32.mrb[0].mxu0
        %600 = vmatprep.mubr.f32.mxu0 0.0
        %601 = vmatmul.mubr.f32.gmra.mrb[0].mxu0 %v523
        %v602 = vpop.f32.mrb[0].mxu0
        %v603 = vadd.f32 0.0, %v602
        %v604 = vpop.f32.mrb[0].mxu0
        %605 = vdwg.mxu0
        %v607 = vsel %vm518, %v423, 0
        %v610 = vsel %vm518, %v429, 0
        %v613 = vsel %vm518, %v425, 0
        %v616 = vsel %vm518, %v431, 0
        %618 = vmatprep.subr.mxu0 0.0
        %619 = vmatpush1.xpose.msra.mxu0 %v613
        %620 = vmatprep.subr.mxu0 0.0
        %621 = vmatpush1.xpose.msra.mxu0 %v616
        %622 = vmatprep.subr.mxu0 0.0
        %623 = vmatpush1.xpose.msra.mxu0 0.0
        %624 = vmatprep.subr.mxu0 0.0
        %625 = vmatpush1.xpose.msra.mxu0 0.0
        %626 = vmatprep.subr.mxu0 0.0
        %627 = vmatpush1.xpose.msra.mxu0 0.0
        %628 = vmatprep.subr.mxu0 0.0
        %629 = vmatpush1.xpose.msra.mxu0 0.0
        %630 = vmatprep.subr.mxu0 0.0
        %631 = vmatpush1.xpose.msra.mxu0 0.0
        %632 = vmatprep.subr.mxu0 0.0
        %633 = vmatpush1.xpose.msra.mxu0 0.0
        %634 = vmatprep.subr.mxu0 0.0
        %635 = vmatpush1.xpose.msra.mxu0 0.0
        %636 = vmatprep.subr.mxu0 0.0
        %637 = vmatpush1.xpose.msra.mxu0 0.0
        %638 = vmatprep.subr.mxu0 0.0
        %639 = vmatpush1.xpose.msra.mxu0 0.0
        %640 = vmatprep.subr.mxu0 0.0
        %641 = vmatpush1.xpose.msra.mxu0 0.0
        %642 = vmatprep.subr.mxu0 0.0
        %643 = vmatpush1.xpose.msra.mxu0 0.0
        %644 = vmatprep.subr.mxu0 0.0
        %645 = vmatpush1.xpose.msra.mxu0 0.0
        %646 = vmatprep.subr.mxu0 0.0
        %647 = vmatpush1.xpose.msra.mxu0 0.0
        %648 = vmatprep.subr.mxu0 0.0
        %649 = vmatpush1.xpose.msra.mxu0 0.0
        %650 = vmatprep.subr.mxu0 0.0
        %651 = vmatpush1.xpose.msra.mxu0 0.0
        %652 = vmatprep.subr.mxu0 0.0
        %653 = vmatpush1.xpose.msra.mxu0 0.0
        %654 = vmatprep.subr.mxu0 0.0
        %655 = vmatpush1.xpose.msra.mxu0 0.0
        %656 = vmatprep.subr.mxu0 0.0
        %657 = vmatpush1.xpose.msra.mxu0 0.0
        %658 = vmatprep.subr.mxu0 0.0
        %659 = vmatpush1.xpose.msra.mxu0 0.0
        %660 = vmatprep.subr.mxu0 0.0
        %661 = vmatpush1.xpose.msra.mxu0 0.0
        %662 = vmatprep.subr.mxu0 0.0
        %663 = vmatpush1.xpose.msra.mxu0 0.0
        %664 = vmatprep.subr.mxu0 0.0
        %665 = vmatpush1.xpose.msra.mxu0 0.0
        %666 = vmatprep.subr.mxu0 0.0
        %667 = vmatpush1.xpose.msra.mxu0 0.0
        %668 = vmatprep.subr.mxu0 0.0
        %669 = vmatpush1.xpose.msra.mxu0 0.0
        %670 = vmatprep.subr.mxu0 0.0
        %671 = vmatpush1.xpose.msra.mxu0 0.0
        %672 = vmatprep.subr.mxu0 0.0
        %673 = vmatpush1.xpose.msra.mxu0 0.0
        %674 = vmatprep.subr.mxu0 0.0
        %675 = vmatpush1.xpose.msra.mxu0 0.0
        %676 = vmatprep.subr.mxu0 0.0
        %677 = vmatpush1.xpose.msra.mxu0 0.0
        %678 = vmatprep.subr.mxu0 0.0
        %679 = vmatpush1.xpose.msra.mxu0 0.0
        %680 = vmatprep.subr.mxu0 0.0
        %681 = vmatpush1.xpose.msra.mxu0 0.0
        %682 = vmatprep.mubr.f32.mxu0 0.0
        %683 = vmatmul.mubr.f32.gmra.mrb[0].mxu0 %v607
        %v684 = vpop.f32.mrb[0].mxu0
        %v685 = vadd.f32 0.0, %v684
        %v686 = vpop.f32.mrb[0].mxu0
        %687 = vmatprep.mubr.f32.mxu0 0.0
        %688 = vmatmul.mubr.f32.gmra.mrb[0].mxu0 %v610
        %v689 = vpop.f32.mrb[0].mxu0
        %v690 = vadd.f32 0.0, %v689
        %v691 = vpop.f32.mrb[0].mxu0
        %692 = vdwg.mxu0
        %vm693 = vcmask 130048
        %v694 = vsel %vm693, %v598, -inf
        %695 = vmax.xlane.f32.xlu0 %v694
        %v696 = vpop.xlane.xlu0 %695
        %v697 = vsel %vm693, %v603, -inf
        %698 = vmax.xlane.f32.xlu0 %v697
        %v699 = vpop.xlane.xlu0 %698
        %v700 = vsel %vm693, %v685, -inf
        %701 = vmax.xlane.f32.xlu0 %v700
        %v702 = vpop.xlane.xlu0 %701
        %v703 = vsel %vm693, %v690, -inf
        %704 = vmax.xlane.f32.xlu0 %v703
        %v705 = vpop.xlane.xlu0 %704
        %v706 = vsub.f32 %v598, %v696
        %v707 = vsub.f32 %v603, %v699
        %v708 = vsub.f32 %v685, %v702
        %v709 = vsub.f32 %v690, %v705
        %v710 = vmul.f32 %v706, 1.442695
        %v711 = vpow.pop %v710
        %v712 = vmul.f32 %v707, 1.442695
        %v713 = vpow.pop %v712
        %v714 = vmul.f32 %v708, 1.442695
        %v715 = vpow.pop %v714
        %v716 = vmul.f32 %v709, 1.442695
        %v717 = vpow.pop %v716
        %v718 = vsel %vm693, %v711, 0.0
        %719 = vadd.xlane.f32.xlu0 %v718
        %v720 = vpop.xlane.xlu0 %719
        %v721 = vsel %vm693, %v713, 0.0
        %722 = vadd.xlane.f32.xlu0 %v721
        %v723 = vpop.xlane.xlu0 %722
        %v724 = vsel %vm693, %v715, 0.0
        %725 = vadd.xlane.f32.xlu0 %v724
        %v726 = vpop.xlane.xlu0 %725
        %v727 = vsel %vm693, %v717, 0.0
        %728 = vadd.xlane.f32.xlu0 %v727
        %v729 = vpop.xlane.xlu0 %728
        %v730 = vrcp.pop %v720
        %v731 = vrcp.pop %v723
        %v732 = vrcp.pop %v726
        %v733 = vrcp.pop %v729
        %v734 = vmul.f32 %v711, %v730
        %v735 = vmul.f32 %v713, %v731
        %v736 = vmul.f32 %v715, %v732
        %v737 = vmul.f32 %v717, %v733
        %v739 = vsel %vm693, %v734, 0
        %v742 = vsel %vm693, %v735, 0
        %744 = vmatprep.subr.mxu0 0.0
        %745 = vmatpush1.msra.mxu0 %v500
        %746 = vmatprep.subr.mxu0 0.0
        %747 = vmatpush1.msra.mxu0 %v505
        %748 = vmatprep.subr.mxu0 0.0
        %749 = vmatpush1.msra.mxu0 0.0
        %750 = vmatprep.subr.mxu0 0.0
        %751 = vmatpush1.msra.mxu0 0.0
        %752 = vmatprep.subr.mxu0 0.0
        %753 = vmatpush1.msra.mxu0 0.0
        %754 = vmatprep.subr.mxu0 0.0
        %755 = vmatpush1.msra.mxu0 0.0
        %756 = vmatprep.subr.mxu0 0.0
        %757 = vmatpush1.msra.mxu0 0.0
        %758 = vmatprep.subr.mxu0 0.0
        %759 = vmatpush1.msra.mxu0 0.0
        %760 = vmatprep.subr.mxu0 0.0
        %761 = vmatpush1.msra.mxu0 0.0
        %762 = vmatprep.subr.mxu0 0.0
        %763 = vmatpush1.msra.mxu0 0.0
        %764 = vmatprep.subr.mxu0 0.0
        %765 = vmatpush1.msra.mxu0 0.0
        %766 = vmatprep.subr.mxu0 0.0
        %767 = vmatpush1.msra.mxu0 0.0
        %768 = vmatprep.subr.mxu0 0.0
        %769 = vmatpush1.msra.mxu0 0.0
        %770 = vmatprep.subr.mxu0 0.0
        %771 = vmatpush1.msra.mxu0 0.0
        %772 = vmatprep.subr.mxu0 0.0
        %773 = vmatpush1.msra.mxu0 0.0
        %774 = vmatprep.subr.mxu0 0.0
        %775 = vmatpush1.msra.mxu0 0.0
        %776 = vmatprep.subr.mxu0 0.0
        %777 = vmatpush1.msra.mxu0 0.0
        %778 = vmatprep.subr.mxu0 0.0
        %779 = vmatpush1.msra.mxu0 0.0
        %780 = vmatprep.subr.mxu0 0.0
        %781 = vmatpush1.msra.mxu0 0.0
        %782 = vmatprep.subr.mxu0 0.0
        %783 = vmatpush1.msra.mxu0 0.0
        %784 = vmatprep.subr.mxu0 0.0
        %785 = vmatpush1.msra.mxu0 0.0
        %786 = vmatprep.subr.mxu0 0.0
        %787 = vmatpush1.msra.mxu0 0.0
        %788 = vmatprep.subr.mxu0 0.0
        %789 = vmatpush1.msra.mxu0 0.0
        %790 = vmatprep.subr.mxu0 0.0
        %791 = vmatpush1.msra.mxu0 0.0
        %792 = vmatprep.subr.mxu0 0.0
        %793 = vmatpush1.msra.mxu0 0.0
        %794 = vmatprep.subr.mxu0 0.0
        %795 = vmatpush1.msra.mxu0 0.0
        %796 = vmatprep.subr.mxu0 0.0
        %797 = vmatpush1.msra.mxu0 0.0
        %798 = vmatprep.subr.mxu0 0.0
        %799 = vmatpush1.msra.mxu0 0.0
        %800 = vmatprep.subr.mxu0 0.0
        %801 = vmatpush1.msra.mxu0 0.0
        %802 = vmatprep.subr.mxu0 0.0
        %803 = vmatpush1.msra.mxu0 0.0
        %804 = vmatprep.subr.mxu0 0.0
        %805 = vmatpush1.msra.mxu0 0.0
        %806 = vmatprep.subr.mxu0 0.0
        %807 = vmatpush1.msra.mxu0 0.0
        %808 = vmatprep.mubr.f32.mxu0 0.0
        %809 = vmatmul.mubr.f32.gmra.mrb[0].mxu0 %v739
        %v810 = vpop.f32.mrb[0].mxu0
        %v811 = vadd.f32 0.0, %v810
        %v812 = vpop.f32.mrb[0].mxu0
        %813 = vmatprep.mubr.f32.mxu0 0.0
        %814 = vmatmul.mubr.f32.gmra.mrb[0].mxu0 %v742
        %v815 = vpop.f32.mrb[0].mxu0
        %v816 = vadd.f32 0.0, %v815
        %v817 = vpop.f32.mrb[0].mxu0
        %818 = vdwg.mxu0
        %v820 = vsel %vm693, %v736, 0
        %v823 = vsel %vm693, %v737, 0
        %825 = vmatprep.subr.mxu0 0.0
        %826 = vmatpush1.msra.mxu0 %v510
        %827 = vmatprep.subr.mxu0 0.0
        %828 = vmatpush1.msra.mxu0 %v515
        %829 = vmatprep.subr.mxu0 0.0
        %830 = vmatpush1.msra.mxu0 0.0
        %831 = vmatprep.subr.mxu0 0.0
        %832 = vmatpush1.msra.mxu0 0.0
        %833 = vmatprep.subr.mxu0 0.0
        %834 = vmatpush1.msra.mxu0 0.0
        %835 = vmatprep.subr.mxu0 0.0
        %836 = vmatpush1.msra.mxu0 0.0
        %837 = vmatprep.subr.mxu0 0.0
        %838 = vmatpush1.msra.mxu0 0.0
        %839 = vmatprep.subr.mxu0 0.0
        %840 = vmatpush1.msra.mxu0 0.0
        %841 = vmatprep.subr.mxu0 0.0
        %842 = vmatpush1.msra.mxu0 0.0
        %843 = vmatprep.subr.mxu0 0.0
        %844 = vmatpush1.msra.mxu0 0.0
        %845 = vmatprep.subr.mxu0 0.0
        %846 = vmatpush1.msra.mxu0 0.0
        %847 = vmatprep.subr.mxu0 0.0
        %848 = vmatpush1.msra.mxu0 0.0
        %849 = vmatprep.subr.mxu0 0.0
        %850 = vmatpush1.msra.mxu0 0.0
        %851 = vmatprep.subr.mxu0 0.0
        %852 = vmatpush1.msra.mxu0 0.0
        %853 = vmatprep.subr.mxu0 0.0
        %854 = vmatpush1.msra.mxu0 0.0
        %855 = vmatprep.subr.mxu0 0.0
        %856 = vmatpush1.msra.mxu0 0.0
        %857 = vmatprep.subr.mxu0 0.0
        %858 = vmatpush1.msra.mxu0 0.0
        %859 = vmatprep.subr.mxu0 0.0
        %860 = vmatpush1.msra.mxu0 0.0
        %861 = vmatprep.subr.mxu0 0.0
        %862 = vmatpush1.msra.mxu0 0.0
        %863 = vmatprep.subr.mxu0 0.0
        %864 = vmatpush1.msra.mxu0 0.0
        %865 = vmatprep.subr.mxu0 0.0
        %866 = vmatpush1.msra.mxu0 0.0
        %867 = vmatprep.subr.mxu0 0.0
        %868 = vmatpush1.msra.mxu0 0.0
        %869 = vmatprep.subr.mxu0 0.0
        %870 = vmatpush1.msra.mxu0 0.0
        %871 = vmatprep.subr.mxu0 0.0
        %872 = vmatpush1.msra.mxu0 0.0
        %873 = vmatprep.subr.mxu0 0.0
        %874 = vmatpush1.msra.mxu0 0.0
        %875 = vmatprep.subr.mxu0 0.0
        %876 = vmatpush1.msra.mxu0 0.0
        %877 = vmatprep.subr.mxu0 0.0
        %878 = vmatpush1.msra.mxu0 0.0
        %879 = vmatprep.subr.mxu0 0.0
        %880 = vmatpush1.msra.mxu0 0.0
        %881 = vmatprep.subr.mxu0 0.0
        %882 = vmatpush1.msra.mxu0 0.0
        %883 = vmatprep.subr.mxu0 0.0
        %884 = vmatpush1.msra.mxu0 0.0
        %885 = vmatprep.subr.mxu0 0.0
        %886 = vmatpush1.msra.mxu0 0.0
        %887 = vmatprep.subr.mxu0 0.0
        %888 = vmatpush1.msra.mxu0 0.0
        %889 = vmatprep.mubr.f32.mxu0 0.0
        %890 = vmatmul.mubr.f32.gmra.mrb[0].mxu0 %v820
        %v891 = vpop.f32.mrb[0].mxu0
        %v892 = vadd.f32 0.0, %v891
        %v893 = vpop.f32.mrb[0].mxu0
        %894 = vmatprep.mubr.f32.mxu0 0.0
        %895 = vmatmul.mubr.f32.gmra.mrb[0].mxu0 %v823
        %v896 = vpop.f32.mrb[0].mxu0
        %v897 = vadd.f32 0.0, %v896
        %v898 = vpop.f32.mrb[0].mxu0
        %899 = vdwg.mxu0
        %900 = vrot.lane.b32.xlu0 %v411, 96
        %v901 = vpop.permute.xlu0 %900
        %902 = vrot.lane.b32.xlu0 %v417, 96
        %v903 = vpop.permute.xlu0 %902
        %904 = vrot.lane.b32.xlu0 %v413, 96
        %v905 = vpop.permute.xlu0 %904
        %906 = vrot.lane.b32.xlu0 %v419, 96
        %v907 = vpop.permute.xlu0 %906
        %v908 = vsel %vm518, %v901, 0
        %v910 = vsel %vm518, %v903, 0
        %v912 = vsel %vm518, %v905, 0
        %v914 = vsel %vm518, %v907, 0
        %916 = vmatprep.subr.mxu0 0.0
        %917 = vmatpush1.xpose.msra.mxu0 %v912
        %918 = vmatprep.subr.mxu0 0.0
        %919 = vmatpush1.xpose.msra.mxu0 %v914
        %920 = vmatprep.subr.mxu0 0.0
        %921 = vmatpush1.xpose.msra.mxu0 0.0
        %922 = vmatprep.subr.mxu0 0.0
        %923 = vmatpush1.xpose.msra.mxu0 0.0
        %924 = vmatprep.subr.mxu0 0.0
        %925 = vmatpush1.xpose.msra.mxu0 0.0
        %926 = vmatprep.subr.mxu0 0.0
        %927 = vmatpush1.xpose.msra.mxu0 0.0
        %928 = vmatprep.subr.mxu0 0.0
        %929 = vmatpush1.xpose.msra.mxu0 0.0
        %930 = vmatprep.subr.mxu0 0.0
        %931 = vmatpush1.xpose.msra.mxu0 0.0
        %932 = vmatprep.subr.mxu0 0.0
        %933 = vmatpush1.xpose.msra.mxu0 0.0
        %934 = vmatprep.subr.mxu0 0.0
        %935 = vmatpush1.xpose.msra.mxu0 0.0
        %936 = vmatprep.subr.mxu0 0.0
        %937 = vmatpush1.xpose.msra.mxu0 0.0
        %938 = vmatprep.subr.mxu0 0.0
        %939 = vmatpush1.xpose.msra.mxu0 0.0
        %940 = vmatprep.subr.mxu0 0.0
        %941 = vmatpush1.xpose.msra.mxu0 0.0
        %942 = vmatprep.subr.mxu0 0.0
        %943 = vmatpush1.xpose.msra.mxu0 0.0
        %944 = vmatprep.subr.mxu0 0.0
        %945 = vmatpush1.xpose.msra.mxu0 0.0
        %946 = vmatprep.subr.mxu0 0.0
        %947 = vmatpush1.xpose.msra.mxu0 0.0
        %948 = vmatprep.subr.mxu0 0.0
        %949 = vmatpush1.xpose.msra.mxu0 0.0
        %950 = vmatprep.subr.mxu0 0.0
        %951 = vmatpush1.xpose.msra.mxu0 0.0
        %952 = vmatprep.subr.mxu0 0.0
        %953 = vmatpush1.xpose.msra.mxu0 0.0
        %954 = vmatprep.subr.mxu0 0.0
        %955 = vmatpush1.xpose.msra.mxu0 0.0
        %956 = vmatprep.subr.mxu0 0.0
        %957 = vmatpush1.xpose.msra.mxu0 0.0
        %958 = vmatprep.subr.mxu0 0.0
        %959 = vmatpush1.xpose.msra.mxu0 0.0
        %960 = vmatprep.subr.mxu0 0.0
        %961 = vmatpush1.xpose.msra.mxu0 0.0
        %962 = vmatprep.subr.mxu0 0.0
        %963 = vmatpush1.xpose.msra.mxu0 0.0
        %964 = vmatprep.subr.mxu0 0.0
        %965 = vmatpush1.xpose.msra.mxu0 0.0
        %966 = vmatprep.subr.mxu0 0.0
        %967 = vmatpush1.xpose.msra.mxu0 0.0
        %968 = vmatprep.subr.mxu0 0.0
        %969 = vmatpush1.xpose.msra.mxu0 0.0
        %970 = vmatprep.subr.mxu0 0.0
        %971 = vmatpush1.xpose.msra.mxu0 0.0
        %972 = vmatprep.subr.mxu0 0.0
        %973 = vmatpush1.xpose.msra.mxu0 0.0
        %974 = vmatprep.subr.mxu0 0.0
        %975 = vmatpush1.xpose.msra.mxu0 0.0
        %976 = vmatprep.subr.mxu0 0.0
        %977 = vmatpush1.xpose.msra.mxu0 0.0
        %978 = vmatprep.subr.mxu0 0.0
        %979 = vmatpush1.xpose.msra.mxu0 0.0
        %980 = vmatprep.mubr.f32.mxu0 0.0
        %981 = vmatmul.mubr.f32.gmra.mrb[0].mxu0 %v908
        %v982 = vpop.f32.mrb[0].mxu0
        %v983 = vadd.f32 0.0, %v982
        %v984 = vpop.f32.mrb[0].mxu0
        %985 = vmatprep.mubr.f32.mxu0 0.0
        %986 = vmatmul.mubr.f32.gmra.mrb[0].mxu0 %v910
        %v987 = vpop.f32.mrb[0].mxu0
        %v988 = vadd.f32 0.0, %v987
        %v989 = vpop.f32.mrb[0].mxu0
        %990 = vdwg.mxu0
        %991 = vrot.lane.b32.xlu0 %v423, 96
        %v992 = vpop.permute.xlu0 %991
        %993 = vrot.lane.b32.xlu0 %v429, 96
        %v994 = vpop.permute.xlu0 %993
        %995 = vrot.lane.b32.xlu0 %v425, 96
        %v996 = vpop.permute.xlu0 %995
        %997 = vrot.lane.b32.xlu0 %v431, 96
        %v998 = vpop.permute.xlu0 %997
        %v999 = vsel %vm518, %v992, 0
        %v1001 = vsel %vm518, %v994, 0
        %v1003 = vsel %vm518, %v996, 0
        %v1005 = vsel %vm518, %v998, 0
        %1007 = vmatprep.subr.mxu0 0.0
        %1008 = vmatpush1.xpose.msra.mxu0 %v1003
        %1009 = vmatprep.subr.mxu0 0.0
        %1010 = vmatpush1.xpose.msra.mxu0 %v1005
        %1011 = vmatprep.subr.mxu0 0.0
        %1012 = vmatpush1.xpose.msra.mxu0 0.0
        %1013 = vmatprep.subr.mxu0 0.0
        %1014 = vmatpush1.xpose.msra.mxu0 0.0
        %1015 = vmatprep.subr.mxu0 0.0
        %1016 = vmatpush1.xpose.msra.mxu0 0.0
        %1017 = vmatprep.subr.mxu0 0.0
        %1018 = vmatpush1.xpose.msra.mxu0 0.0
        %1019 = vmatprep.subr.mxu0 0.0
        %1020 = vmatpush1.xpose.msra.mxu0 0.0
        %1021 = vmatprep.subr.mxu0 0.0
        %1022 = vmatpush1.xpose.msra.mxu0 0.0
        %1023 = vmatprep.subr.mxu0 0.0
        %1024 = vmatpush1.xpose.msra.mxu0 0.0
        %1025 = vmatprep.subr.mxu0 0.0
        %1026 = vmatpush1.xpose.msra.mxu0 0.0
        %1027 = vmatprep.subr.mxu0 0.0
        %1028 = vmatpush1.xpose.msra.mxu0 0.0
        %1029 = vmatprep.subr.mxu0 0.0
        %1030 = vmatpush1.xpose.msra.mxu0 0.0
        %1031 = vmatprep.subr.mxu0 0.0
        %1032 = vmatpush1.xpose.msra.mxu0 0.0
        %1033 = vmatprep.subr.mxu0 0.0
        %1034 = vmatpush1.xpose.msra.mxu0 0.0
        %1035 = vmatprep.subr.mxu0 0.0
        %1036 = vmatpush1.xpose.msra.mxu0 0.0
        %1037 = vmatprep.subr.mxu0 0.0
        %1038 = vmatpush1.xpose.msra.mxu0 0.0
        %1039 = vmatprep.subr.mxu0 0.0
        %1040 = vmatpush1.xpose.msra.mxu0 0.0
        %1041 = vmatprep.subr.mxu0 0.0
        %1042 = vmatpush1.xpose.msra.mxu0 0.0
        %1043 = vmatprep.subr.mxu0 0.0
        %1044 = vmatpush1.xpose.msra.mxu0 0.0
        %1045 = vmatprep.subr.mxu0 0.0
        %1046 = vmatpush1.xpose.msra.mxu0 0.0
        %1047 = vmatprep.subr.mxu0 0.0
        %1048 = vmatpush1.xpose.msra.mxu0 0.0
        %1049 = vmatprep.subr.mxu0 0.0
        %1050 = vmatpush1.xpose.msra.mxu0 0.0
        %1051 = vmatprep.subr.mxu0 0.0
        %1052 = vmatpush1.xpose.msra.mxu0 0.0
        %1053 = vmatprep.subr.mxu0 0.0
        %1054 = vmatpush1.xpose.msra.mxu0 0.0
        %1055 = vmatprep.subr.mxu0 0.0
        %1056 = vmatpush1.xpose.msra.mxu0 0.0
        %1057 = vmatprep.subr.mxu0 0.0
        %1058 = vmatpush1.xpose.msra.mxu0 0.0
        %1059 = vmatprep.subr.mxu0 0.0
        %1060 = vmatpush1.xpose.msra.mxu0 0.0
        %1061 = vmatprep.subr.mxu0 0.0
        %1062 = vmatpush1.xpose.msra.mxu0 0.0
        %1063 = vmatprep.subr.mxu0 0.0
        %1064 = vmatpush1.xpose.msra.mxu0 0.0
        %1065 = vmatprep.subr.mxu0 0.0
        %1066 = vmatpush1.xpose.msra.mxu0 0.0
        %1067 = vmatprep.subr.mxu0 0.0
        %1068 = vmatpush1.xpose.msra.mxu0 0.0
        %1069 = vmatprep.subr.mxu0 0.0
        %1070 = vmatpush1.xpose.msra.mxu0 0.0
        %1071 = vmatprep.mubr.f32.mxu0 0.0
        %1072 = vmatmul.mubr.f32.gmra.mrb[0].mxu0 %v999
        %v1073 = vpop.f32.mrb[0].mxu0
        %v1074 = vadd.f32 0.0, %v1073
        %v1075 = vpop.f32.mrb[0].mxu0
        %1076 = vmatprep.mubr.f32.mxu0 0.0
        %1077 = vmatmul.mubr.f32.gmra.mrb[0].mxu0 %v1001
        %v1078 = vpop.f32.mrb[0].mxu0
        %v1079 = vadd.f32 0.0, %v1078
        %v1080 = vpop.f32.mrb[0].mxu0
        %1081 = vdwg.mxu0
        %v1082 = vsel %vm693, %v983, -inf
        %1083 = vmax.xlane.f32.xlu0 %v1082
        %v1084 = vpop.xlane.xlu0 %1083
        %v1085 = vsel %vm693, %v988, -inf
        %1086 = vmax.xlane.f32.xlu0 %v1085
        %v1087 = vpop.xlane.xlu0 %1086
        %v1088 = vsel %vm693, %v1074, -inf
        %1089 = vmax.xlane.f32.xlu0 %v1088
        %v1090 = vpop.xlane.xlu0 %1089
        %v1091 = vsel %vm693, %v1079, -inf
        %1092 = vmax.xlane.f32.xlu0 %v1091
        %v1093 = vpop.xlane.xlu0 %1092
        %v1094 = vsub.f32 %v983, %v1084
        %v1095 = vsub.f32 %v988, %v1087
        %v1096 = vsub.f32 %v1074, %v1090
        %v1097 = vsub.f32 %v1079, %v1093
        %v1098 = vmul.f32 %v1094, 1.442695
        %v1099 = vpow.pop %v1098
        %v1100 = vmul.f32 %v1095, 1.442695
        %v1101 = vpow.pop %v1100
        %v1102 = vmul.f32 %v1096, 1.442695
        %v1103 = vpow.pop %v1102
        %v1104 = vmul.f32 %v1097, 1.442695
        %v1105 = vpow.pop %v1104
        %v1106 = vsel %vm693, %v1099, 0.0
        %1107 = vadd.xlane.f32.xlu0 %v1106
        %v1108 = vpop.xlane.xlu0 %1107
        %v1109 = vsel %vm693, %v1101, 0.0
        %1110 = vadd.xlane.f32.xlu0 %v1109
        %v1111 = vpop.xlane.xlu0 %1110
        %v1112 = vsel %vm693, %v1103, 0.0
        %1113 = vadd.xlane.f32.xlu0 %v1112
        %v1114 = vpop.xlane.xlu0 %1113
        %v1115 = vsel %vm693, %v1105, 0.0
        %1116 = vadd.xlane.f32.xlu0 %v1115
        %v1117 = vpop.xlane.xlu0 %1116
        %v1118 = vrcp.pop %v1108
        %v1119 = vrcp.pop %v1111
        %v1120 = vrcp.pop %v1114
        %v1121 = vrcp.pop %v1117
        %v1122 = vmul.f32 %v1099, %v1118
        %v1123 = vmul.f32 %v1101, %v1119
        %v1124 = vmul.f32 %v1103, %v1120
        %v1125 = vmul.f32 %v1105, %v1121
        %1128 = vrot.lane.b32.xlu0 %v500, 96
        %v1129 = vpop.permute.xlu0 %1128
        %1130 = vrot.lane.b32.xlu0 %v505, 96
        %v1131 = vpop.permute.xlu0 %1130
        %v1135 = vsel %vm693, %v1122, 0
        %v1138 = vsel %vm693, %v1123, 0
        %1140 = vmatprep.subr.mxu0 0.0
        %1141 = vmatpush1.msra.mxu0 %v1129
        %1142 = vmatprep.subr.mxu0 0.0
        %1143 = vmatpush1.msra.mxu0 %v1131
        %1144 = vmatprep.subr.mxu0 0.0
        %1145 = vmatpush1.msra.mxu0 0.0
        %1146 = vmatprep.subr.mxu0 0.0
        %1147 = vmatpush1.msra.mxu0 0.0
        %1148 = vmatprep.subr.mxu0 0.0
        %1149 = vmatpush1.msra.mxu0 0.0
        %1150 = vmatprep.subr.mxu0 0.0
        %1151 = vmatpush1.msra.mxu0 0.0
        %1152 = vmatprep.subr.mxu0 0.0
        %1153 = vmatpush1.msra.mxu0 0.0
        %1154 = vmatprep.subr.mxu0 0.0
        %1155 = vmatpush1.msra.mxu0 0.0
        %1156 = vmatprep.subr.mxu0 0.0
        %1157 = vmatpush1.msra.mxu0 0.0
        %1158 = vmatprep.subr.mxu0 0.0
        %1159 = vmatpush1.msra.mxu0 0.0
        %1160 = vmatprep.subr.mxu0 0.0
        %1161 = vmatpush1.msra.mxu0 0.0
        %1162 = vmatprep.subr.mxu0 0.0
        %1163 = vmatpush1.msra.mxu0 0.0
        %1164 = vmatprep.subr.mxu0 0.0
        %1165 = vmatpush1.msra.mxu0 0.0
        %1166 = vmatprep.subr.mxu0 0.0
        %1167 = vmatpush1.msra.mxu0 0.0
        %1168 = vmatprep.subr.mxu0 0.0
        %1169 = vmatpush1.msra.mxu0 0.0
        %1170 = vmatprep.subr.mxu0 0.0
        %1171 = vmatpush1.msra.mxu0 0.0
        %1172 = vmatprep.subr.mxu0 0.0
        %1173 = vmatpush1.msra.mxu0 0.0
        %1174 = vmatprep.subr.mxu0 0.0
        %1175 = vmatpush1.msra.mxu0 0.0
        %1176 = vmatprep.subr.mxu0 0.0
        %1177 = vmatpush1.msra.mxu0 0.0
        %1178 = vmatprep.subr.mxu0 0.0
        %1179 = vmatpush1.msra.mxu0 0.0
        %1180 = vmatprep.subr.mxu0 0.0
        %1181 = vmatpush1.msra.mxu0 0.0
        %1182 = vmatprep.subr.mxu0 0.0
        %1183 = vmatpush1.msra.mxu0 0.0
        %1184 = vmatprep.subr.mxu0 0.0
        %1185 = vmatpush1.msra.mxu0 0.0
        %1186 = vmatprep.subr.mxu0 0.0
        %1187 = vmatpush1.msra.mxu0 0.0
        %1188 = vmatprep.subr.mxu0 0.0
        %1189 = vmatpush1.msra.mxu0 0.0
        %1190 = vmatprep.subr.mxu0 0.0
        %1191 = vmatpush1.msra.mxu0 0.0
        %1192 = vmatprep.subr.mxu0 0.0
        %1193 = vmatpush1.msra.mxu0 0.0
        %1194 = vmatprep.subr.mxu0 0.0
        %1195 = vmatpush1.msra.mxu0 0.0
        %1196 = vmatprep.subr.mxu0 0.0
        %1197 = vmatpush1.msra.mxu0 0.0
        %1198 = vmatprep.subr.mxu0 0.0
        %1199 = vmatpush1.msra.mxu0 0.0
        %1200 = vmatprep.subr.mxu0 0.0
        %1201 = vmatpush1.msra.mxu0 0.0
        %1202 = vmatprep.subr.mxu0 0.0
        %1203 = vmatpush1.msra.mxu0 0.0
        %1204 = vmatprep.mubr.f32.mxu0 0.0
        %1205 = vmatmul.mubr.f32.gmra.mrb[0].mxu0 %v1135
        %v1206 = vpop.f32.mrb[0].mxu0
        %v1207 = vadd.f32 0.0, %v1206
        %v1208 = vpop.f32.mrb[0].mxu0
        %1209 = vmatprep.mubr.f32.mxu0 0.0
        %1210 = vmatmul.mubr.f32.gmra.mrb[0].mxu0 %v1138
        %v1211 = vpop.f32.mrb[0].mxu0
        %v1212 = vadd.f32 0.0, %v1211
        %v1213 = vpop.f32.mrb[0].mxu0
        %1214 = vdwg.mxu0
        %1217 = vrot.lane.b32.xlu0 %v510, 96
        %v1218 = vpop.permute.xlu0 %1217
        %1219 = vrot.lane.b32.xlu0 %v515, 96
        %v1220 = vpop.permute.xlu0 %1219
        %v1224 = vsel %vm693, %v1124, 0
        %v1227 = vsel %vm693, %v1125, 0
        %1229 = vmatprep.subr.mxu0 0.0
        %1230 = vmatpush1.msra.mxu0 %v1218
        %1231 = vmatprep.subr.mxu0 0.0
        %1232 = vmatpush1.msra.mxu0 %v1220
        %1233 = vmatprep.subr.mxu0 0.0
        %1234 = vmatpush1.msra.mxu0 0.0
        %1235 = vmatprep.subr.mxu0 0.0
        %1236 = vmatpush1.msra.mxu0 0.0
        %1237 = vmatprep.subr.mxu0 0.0
        %1238 = vmatpush1.msra.mxu0 0.0
        %1239 = vmatprep.subr.mxu0 0.0
        %1240 = vmatpush1.msra.mxu0 0.0
        %1241 = vmatprep.subr.mxu0 0.0
        %1242 = vmatpush1.msra.mxu0 0.0
        %1243 = vmatprep.subr.mxu0 0.0
        %1244 = vmatpush1.msra.mxu0 0.0
        %1245 = vmatprep.subr.mxu0 0.0
        %1246 = vmatpush1.msra.mxu0 0.0
        %1247 = vmatprep.subr.mxu0 0.0
        %1248 = vmatpush1.msra.mxu0 0.0
        %1249 = vmatprep.subr.mxu0 0.0
        %1250 = vmatpush1.msra.mxu0 0.0
        %1251 = vmatprep.subr.mxu0 0.0
        %1252 = vmatpush1.msra.mxu0 0.0
        %1253 = vmatprep.subr.mxu0 0.0
        %1254 = vmatpush1.msra.mxu0 0.0
        %1255 = vmatprep.subr.mxu0 0.0
        %1256 = vmatpush1.msra.mxu0 0.0
        %1257 = vmatprep.subr.mxu0 0.0
        %1258 = vmatpush1.msra.mxu0 0.0
        %1259 = vmatprep.subr.mxu0 0.0
        %1260 = vmatpush1.msra.mxu0 0.0
        %1261 = vmatprep.subr.mxu0 0.0
        %1262 = vmatpush1.msra.mxu0 0.0
        %1263 = vmatprep.subr.mxu0 0.0
        %1264 = vmatpush1.msra.mxu0 0.0
        %1265 = vmatprep.subr.mxu0 0.0
        %1266 = vmatpush1.msra.mxu0 0.0
        %1267 = vmatprep.subr.mxu0 0.0
        %1268 = vmatpush1.msra.mxu0 0.0
        %1269 = vmatprep.subr.mxu0 0.0
        %1270 = vmatpush1.msra.mxu0 0.0
        %1271 = vmatprep.subr.mxu0 0.0
        %1272 = vmatpush1.msra.mxu0 0.0
        %1273 = vmatprep.subr.mxu0 0.0
        %1274 = vmatpush1.msra.mxu0 0.0
        %1275 = vmatprep.subr.mxu0 0.0
        %1276 = vmatpush1.msra.mxu0 0.0
        %1277 = vmatprep.subr.mxu0 0.0
        %1278 = vmatpush1.msra.mxu0 0.0
        %1279 = vmatprep.subr.mxu0 0.0
        %1280 = vmatpush1.msra.mxu0 0.0
        %1281 = vmatprep.subr.mxu0 0.0
        %1282 = vmatpush1.msra.mxu0 0.0
        %1283 = vmatprep.subr.mxu0 0.0
        %1284 = vmatpush1.msra.mxu0 0.0
        %1285 = vmatprep.subr.mxu0 0.0
        %1286 = vmatpush1.msra.mxu0 0.0
        %1287 = vmatprep.subr.mxu0 0.0
        %1288 = vmatpush1.msra.mxu0 0.0
        %1289 = vmatprep.subr.mxu0 0.0
        %1290 = vmatpush1.msra.mxu0 0.0
        %1291 = vmatprep.subr.mxu0 0.0
        %1292 = vmatpush1.msra.mxu0 0.0
        %1293 = vmatprep.mubr.f32.mxu0 0.0
        %1294 = vmatmul.mubr.f32.gmra.mrb[0].mxu0 %v1224
        %v1295 = vpop.f32.mrb[0].mxu0
        %v1296 = vadd.f32 0.0, %v1295
        %v1297 = vpop.f32.mrb[0].mxu0
        %1298 = vmatprep.mubr.f32.mxu0 0.0
        %1299 = vmatmul.mubr.f32.gmra.mrb[0].mxu0 %v1227
        %v1300 = vpop.f32.mrb[0].mxu0
        %v1301 = vadd.f32 0.0, %v1300
        %v1302 = vpop.f32.mrb[0].mxu0
        %1303 = vdwg.mxu0
        %1304 = vrot.lane.b32.xlu0 %v411, 64
        %v1305 = vpop.permute.xlu0 %1304
        %1306 = vrot.lane.b32.xlu0 %v417, 64
        %v1307 = vpop.permute.xlu0 %1306
        %1308 = vrot.lane.b32.xlu0 %v413, 64
        %v1309 = vpop.permute.xlu0 %1308
        %1310 = vrot.lane.b32.xlu0 %v419, 64
        %v1311 = vpop.permute.xlu0 %1310
        %v1312 = vsel %vm518, %v1305, 0
        %v1314 = vsel %vm518, %v1307, 0
        %v1316 = vsel %vm518, %v1309, 0
        %v1318 = vsel %vm518, %v1311, 0
        %1320 = vmatprep.subr.mxu0 0.0
        %1321 = vmatpush1.xpose.msra.mxu0 %v1316
        %1322 = vmatprep.subr.mxu0 0.0
        %1323 = vmatpush1.xpose.msra.mxu0 %v1318
        %1324 = vmatprep.subr.mxu0 0.0
        %1325 = vmatpush1.xpose.msra.mxu0 0.0
        %1326 = vmatprep.subr.mxu0 0.0
        %1327 = vmatpush1.xpose.msra.mxu0 0.0
        %1328 = vmatprep.subr.mxu0 0.0
        %1329 = vmatpush1.xpose.msra.mxu0 0.0
        %1330 = vmatprep.subr.mxu0 0.0
        %1331 = vmatpush1.xpose.msra.mxu0 0.0
        %1332 = vmatprep.subr.mxu0 0.0
        %1333 = vmatpush1.xpose.msra.mxu0 0.0
        %1334 = vmatprep.subr.mxu0 0.0
        %1335 = vmatpush1.xpose.msra.mxu0 0.0
        %1336 = vmatprep.subr.mxu0 0.0
        %1337 = vmatpush1.xpose.msra.mxu0 0.0
        %1338 = vmatprep.subr.mxu0 0.0
        %1339 = vmatpush1.xpose.msra.mxu0 0.0
        %1340 = vmatprep.subr.mxu0 0.0
        %1341 = vmatpush1.xpose.msra.mxu0 0.0
        %1342 = vmatprep.subr.mxu0 0.0
        %1343 = vmatpush1.xpose.msra.mxu0 0.0
        %1344 = vmatprep.subr.mxu0 0.0
        %1345 = vmatpush1.xpose.msra.mxu0 0.0
        %1346 = vmatprep.subr.mxu0 0.0
        %1347 = vmatpush1.xpose.msra.mxu0 0.0
        %1348 = vmatprep.subr.mxu0 0.0
        %1349 = vmatpush1.xpose.msra.mxu0 0.0
        %1350 = vmatprep.subr.mxu0 0.0
        %1351 = vmatpush1.xpose.msra.mxu0 0.0
        %1352 = vmatprep.subr.mxu0 0.0
        %1353 = vmatpush1.xpose.msra.mxu0 0.0
        %1354 = vmatprep.subr.mxu0 0.0
        %1355 = vmatpush1.xpose.msra.mxu0 0.0
        %1356 = vmatprep.subr.mxu0 0.0
        %1357 = vmatpush1.xpose.msra.mxu0 0.0
        %1358 = vmatprep.subr.mxu0 0.0
        %1359 = vmatpush1.xpose.msra.mxu0 0.0
        %1360 = vmatprep.subr.mxu0 0.0
        %1361 = vmatpush1.xpose.msra.mxu0 0.0
        %1362 = vmatprep.subr.mxu0 0.0
        %1363 = vmatpush1.xpose.msra.mxu0 0.0
        %1364 = vmatprep.subr.mxu0 0.0
        %1365 = vmatpush1.xpose.msra.mxu0 0.0
        %1366 = vmatprep.subr.mxu0 0.0
        %1367 = vmatpush1.xpose.msra.mxu0 0.0
        %1368 = vmatprep.subr.mxu0 0.0
        %1369 = vmatpush1.xpose.msra.mxu0 0.0
        %1370 = vmatprep.subr.mxu0 0.0
        %1371 = vmatpush1.xpose.msra.mxu0 0.0
        %1372 = vmatprep.subr.mxu0 0.0
        %1373 = vmatpush1.xpose.msra.mxu0 0.0
        %1374 = vmatprep.subr.mxu0 0.0
        %1375 = vmatpush1.xpose.msra.mxu0 0.0
        %1376 = vmatprep.subr.mxu0 0.0
        %1377 = vmatpush1.xpose.msra.mxu0 0.0
        %1378 = vmatprep.subr.mxu0 0.0
        %1379 = vmatpush1.xpose.msra.mxu0 0.0
        %1380 = vmatprep.subr.mxu0 0.0
        %1381 = vmatpush1.xpose.msra.mxu0 0.0
        %1382 = vmatprep.subr.mxu0 0.0
        %1383 = vmatpush1.xpose.msra.mxu0 0.0
        %1384 = vmatprep.mubr.f32.mxu0 0.0
        %1385 = vmatmul.mubr.f32.gmra.mrb[0].mxu0 %v1312
        %v1386 = vpop.f32.mrb[0].mxu0
        %v1387 = vadd.f32 0.0, %v1386
        %v1388 = vpop.f32.mrb[0].mxu0
        %1389 = vmatprep.mubr.f32.mxu0 0.0
        %1390 = vmatmul.mubr.f32.gmra.mrb[0].mxu0 %v1314
        %v1391 = vpop.f32.mrb[0].mxu0
        %v1392 = vadd.f32 0.0, %v1391
        %v1393 = vpop.f32.mrb[0].mxu0
        %1394 = vdwg.mxu0
        %1395 = vrot.lane.b32.xlu0 %v423, 64
        %v1396 = vpop.permute.xlu0 %1395
        %1397 = vrot.lane.b32.xlu0 %v429, 64
        %v1398 = vpop.permute.xlu0 %1397
        %1399 = vrot.lane.b32.xlu0 %v425, 64
        %v1400 = vpop.permute.xlu0 %1399
        %1401 = vrot.lane.b32.xlu0 %v431, 64
        %v1402 = vpop.permute.xlu0 %1401
        %v1403 = vsel %vm518, %v1396, 0
        %v1405 = vsel %vm518, %v1398, 0
        %v1407 = vsel %vm518, %v1400, 0
        %v1409 = vsel %vm518, %v1402, 0
        %1411 = vmatprep.subr.mxu0 0.0
        %1412 = vmatpush1.xpose.msra.mxu0 %v1407
        %1413 = vmatprep.subr.mxu0 0.0
        %1414 = vmatpush1.xpose.msra.mxu0 %v1409
        %1415 = vmatprep.subr.mxu0 0.0
        %1416 = vmatpush1.xpose.msra.mxu0 0.0
        %1417 = vmatprep.subr.mxu0 0.0
        %1418 = vmatpush1.xpose.msra.mxu0 0.0
        %1419 = vmatprep.subr.mxu0 0.0
        %1420 = vmatpush1.xpose.msra.mxu0 0.0
        %1421 = vmatprep.subr.mxu0 0.0
        %1422 = vmatpush1.xpose.msra.mxu0 0.0
        %1423 = vmatprep.subr.mxu0 0.0
        %1424 = vmatpush1.xpose.msra.mxu0 0.0
        %1425 = vmatprep.subr.mxu0 0.0
        %1426 = vmatpush1.xpose.msra.mxu0 0.0
        %1427 = vmatprep.subr.mxu0 0.0
        %1428 = vmatpush1.xpose.msra.mxu0 0.0
        %1429 = vmatprep.subr.mxu0 0.0
        %1430 = vmatpush1.xpose.msra.mxu0 0.0
        %1431 = vmatprep.subr.mxu0 0.0
        %1432 = vmatpush1.xpose.msra.mxu0 0.0
        %1433 = vmatprep.subr.mxu0 0.0
        %1434 = vmatpush1.xpose.msra.mxu0 0.0
        %1435 = vmatprep.subr.mxu0 0.0
        %1436 = vmatpush1.xpose.msra.mxu0 0.0
        %1437 = vmatprep.subr.mxu0 0.0
        %1438 = vmatpush1.xpose.msra.mxu0 0.0
        %1439 = vmatprep.subr.mxu0 0.0
        %1440 = vmatpush1.xpose.msra.mxu0 0.0
        %1441 = vmatprep.subr.mxu0 0.0
        %1442 = vmatpush1.xpose.msra.mxu0 0.0
        %1443 = vmatprep.subr.mxu0 0.0
        %1444 = vmatpush1.xpose.msra.mxu0 0.0
        %1445 = vmatprep.subr.mxu0 0.0
        %1446 = vmatpush1.xpose.msra.mxu0 0.0
        %1447 = vmatprep.subr.mxu0 0.0
        %1448 = vmatpush1.xpose.msra.mxu0 0.0
        %1449 = vmatprep.subr.mxu0 0.0
        %1450 = vmatpush1.xpose.msra.mxu0 0.0
        %1451 = vmatprep.subr.mxu0 0.0
        %1452 = vmatpush1.xpose.msra.mxu0 0.0
        %1453 = vmatprep.subr.mxu0 0.0
        %1454 = vmatpush1.xpose.msra.mxu0 0.0
        %1455 = vmatprep.subr.mxu0 0.0
        %1456 = vmatpush1.xpose.msra.mxu0 0.0
        %1457 = vmatprep.subr.mxu0 0.0
        %1458 = vmatpush1.xpose.msra.mxu0 0.0
        %1459 = vmatprep.subr.mxu0 0.0
        %1460 = vmatpush1.xpose.msra.mxu0 0.0
        %1461 = vmatprep.subr.mxu0 0.0
        %1462 = vmatpush1.xpose.msra.mxu0 0.0
        %1463 = vmatprep.subr.mxu0 0.0
        %1464 = vmatpush1.xpose.msra.mxu0 0.0
        %1465 = vmatprep.subr.mxu0 0.0
        %1466 = vmatpush1.xpose.msra.mxu0 0.0
        %1467 = vmatprep.subr.mxu0 0.0
        %1468 = vmatpush1.xpose.msra.mxu0 0.0
        %1469 = vmatprep.subr.mxu0 0.0
        %1470 = vmatpush1.xpose.msra.mxu0 0.0
        %1471 = vmatprep.subr.mxu0 0.0
        %1472 = vmatpush1.xpose.msra.mxu0 0.0
        %1473 = vmatprep.subr.mxu0 0.0
        %1474 = vmatpush1.xpose.msra.mxu0 0.0
        %1475 = vmatprep.mubr.f32.mxu0 0.0
        %1476 = vmatmul.mubr.f32.gmra.mrb[0].mxu0 %v1403
        %v1477 = vpop.f32.mrb[0].mxu0
        %v1478 = vadd.f32 0.0, %v1477
        %v1479 = vpop.f32.mrb[0].mxu0
        %1480 = vmatprep.mubr.f32.mxu0 0.0
        %1481 = vmatmul.mubr.f32.gmra.mrb[0].mxu0 %v1405
        %v1482 = vpop.f32.mrb[0].mxu0
        %v1483 = vadd.f32 0.0, %v1482
        %v1484 = vpop.f32.mrb[0].mxu0
        %1485 = vdwg.mxu0
        %v1486 = vsel %vm693, %v1387, -inf
        %1487 = vmax.xlane.f32.xlu0 %v1486
        %v1488 = vpop.xlane.xlu0 %1487
        %v1489 = vsel %vm693, %v1392, -inf
        %1490 = vmax.xlane.f32.xlu0 %v1489
        %v1491 = vpop.xlane.xlu0 %1490
        %v1492 = vsel %vm693, %v1478, -inf
        %1493 = vmax.xlane.f32.xlu0 %v1492
        %v1494 = vpop.xlane.xlu0 %1493
        %v1495 = vsel %vm693, %v1483, -inf
        %1496 = vmax.xlane.f32.xlu0 %v1495
        %v1497 = vpop.xlane.xlu0 %1496
        %v1498 = vsub.f32 %v1387, %v1488
        %v1499 = vsub.f32 %v1392, %v1491
        %v1500 = vsub.f32 %v1478, %v1494
        %v1501 = vsub.f32 %v1483, %v1497
        %v1502 = vmul.f32 %v1498, 1.442695
        %v1503 = vpow.pop %v1502
        %v1504 = vmul.f32 %v1499, 1.442695
        %v1505 = vpow.pop %v1504
        %v1506 = vmul.f32 %v1500, 1.442695
        %v1507 = vpow.pop %v1506
        %v1508 = vmul.f32 %v1501, 1.442695
        %v1509 = vpow.pop %v1508
        %v1510 = vsel %vm693, %v1503, 0.0
        %1511 = vadd.xlane.f32.xlu0 %v1510
        %v1512 = vpop.xlane.xlu0 %1511
        %v1513 = vsel %vm693, %v1505, 0.0
        %1514 = vadd.xlane.f32.xlu0 %v1513
        %v1515 = vpop.xlane.xlu0 %1514
        %v1516 = vsel %vm693, %v1507, 0.0
        %1517 = vadd.xlane.f32.xlu0 %v1516
        %v1518 = vpop.xlane.xlu0 %1517
        %v1519 = vsel %vm693, %v1509, 0.0
        %1520 = vadd.xlane.f32.xlu0 %v1519
        %v1521 = vpop.xlane.xlu0 %1520
        %v1522 = vrcp.pop %v1512
        %v1523 = vrcp.pop %v1515
        %v1524 = vrcp.pop %v1518
        %v1525 = vrcp.pop %v1521
        %v1526 = vmul.f32 %v1503, %v1522
        %v1527 = vmul.f32 %v1505, %v1523
        %v1528 = vmul.f32 %v1507, %v1524
        %v1529 = vmul.f32 %v1509, %v1525
        %1530 = vrot.lane.b32.xlu0 %v500, 64
        %v1531 = vpop.permute.xlu0 %1530
        %1532 = vrot.lane.b32.xlu0 %v505, 64
        %v1533 = vpop.permute.xlu0 %1532
        %v1537 = vsel %vm693, %v1526, 0
        %v1540 = vsel %vm693, %v1527, 0
        %1542 = vmatprep.subr.mxu0 0.0
        %1543 = vmatpush1.msra.mxu0 %v1531
        %1544 = vmatprep.subr.mxu0 0.0
        %1545 = vmatpush1.msra.mxu0 %v1533
        %1546 = vmatprep.subr.mxu0 0.0
        %1547 = vmatpush1.msra.mxu0 0.0
        %1548 = vmatprep.subr.mxu0 0.0
        %1549 = vmatpush1.msra.mxu0 0.0
        %1550 = vmatprep.subr.mxu0 0.0
        %1551 = vmatpush1.msra.mxu0 0.0
        %1552 = vmatprep.subr.mxu0 0.0
        %1553 = vmatpush1.msra.mxu0 0.0
        %1554 = vmatprep.subr.mxu0 0.0
        %1555 = vmatpush1.msra.mxu0 0.0
        %1556 = vmatprep.subr.mxu0 0.0
        %1557 = vmatpush1.msra.mxu0 0.0
        %1558 = vmatprep.subr.mxu0 0.0
        %1559 = vmatpush1.msra.mxu0 0.0
        %1560 = vmatprep.subr.mxu0 0.0
        %1561 = vmatpush1.msra.mxu0 0.0
        %1562 = vmatprep.subr.mxu0 0.0
        %1563 = vmatpush1.msra.mxu0 0.0
        %1564 = vmatprep.subr.mxu0 0.0
        %1565 = vmatpush1.msra.mxu0 0.0
        %1566 = vmatprep.subr.mxu0 0.0
        %1567 = vmatpush1.msra.mxu0 0.0
        %1568 = vmatprep.subr.mxu0 0.0
        %1569 = vmatpush1.msra.mxu0 0.0
        %1570 = vmatprep.subr.mxu0 0.0
        %1571 = vmatpush1.msra.mxu0 0.0
        %1572 = vmatprep.subr.mxu0 0.0
        %1573 = vmatpush1.msra.mxu0 0.0
        %1574 = vmatprep.subr.mxu0 0.0
        %1575 = vmatpush1.msra.mxu0 0.0
        %1576 = vmatprep.subr.mxu0 0.0
        %1577 = vmatpush1.msra.mxu0 0.0
        %1578 = vmatprep.subr.mxu0 0.0
        %1579 = vmatpush1.msra.mxu0 0.0
        %1580 = vmatprep.subr.mxu0 0.0
        %1581 = vmatpush1.msra.mxu0 0.0
        %1582 = vmatprep.subr.mxu0 0.0
        %1583 = vmatpush1.msra.mxu0 0.0
        %1584 = vmatprep.subr.mxu0 0.0
        %1585 = vmatpush1.msra.mxu0 0.0
        %1586 = vmatprep.subr.mxu0 0.0
        %1587 = vmatpush1.msra.mxu0 0.0
        %1588 = vmatprep.subr.mxu0 0.0
        %1589 = vmatpush1.msra.mxu0 0.0
        %1590 = vmatprep.subr.mxu0 0.0
        %1591 = vmatpush1.msra.mxu0 0.0
        %1592 = vmatprep.subr.mxu0 0.0
        %1593 = vmatpush1.msra.mxu0 0.0
        %1594 = vmatprep.subr.mxu0 0.0
        %1595 = vmatpush1.msra.mxu0 0.0
        %1596 = vmatprep.subr.mxu0 0.0
        %1597 = vmatpush1.msra.mxu0 0.0
        %1598 = vmatprep.subr.mxu0 0.0
        %1599 = vmatpush1.msra.mxu0 0.0
        %1600 = vmatprep.subr.mxu0 0.0
        %1601 = vmatpush1.msra.mxu0 0.0
        %1602 = vmatprep.subr.mxu0 0.0
        %1603 = vmatpush1.msra.mxu0 0.0
        %1604 = vmatprep.subr.mxu0 0.0
        %1605 = vmatpush1.msra.mxu0 0.0
        %1606 = vmatprep.mubr.f32.mxu0 0.0
        %1607 = vmatmul.mubr.f32.gmra.mrb[0].mxu0 %v1537
        %v1608 = vpop.f32.mrb[0].mxu0
        %v1609 = vadd.f32 0.0, %v1608
        %v1610 = vpop.f32.mrb[0].mxu0
        %1611 = vmatprep.mubr.f32.mxu0 0.0
        %1612 = vmatmul.mubr.f32.gmra.mrb[0].mxu0 %v1540
        %v1613 = vpop.f32.mrb[0].mxu0
        %v1614 = vadd.f32 0.0, %v1613
        %v1615 = vpop.f32.mrb[0].mxu0
        %1616 = vdwg.mxu0
        %1617 = vrot.lane.b32.xlu0 %v510, 64
        %v1618 = vpop.permute.xlu0 %1617
        %1619 = vrot.lane.b32.xlu0 %v515, 64
        %v1620 = vpop.permute.xlu0 %1619
        %v1624 = vsel %vm693, %v1528, 0
        %v1627 = vsel %vm693, %v1529, 0
        %1629 = vmatprep.subr.mxu0 0.0
        %1630 = vmatpush1.msra.mxu0 %v1618
        %1631 = vmatprep.subr.mxu0 0.0
        %1632 = vmatpush1.msra.mxu0 %v1620
        %1633 = vmatprep.subr.mxu0 0.0
        %1634 = vmatpush1.msra.mxu0 0.0
        %1635 = vmatprep.subr.mxu0 0.0
        %1636 = vmatpush1.msra.mxu0 0.0
        %1637 = vmatprep.subr.mxu0 0.0
        %1638 = vmatpush1.msra.mxu0 0.0
        %1639 = vmatprep.subr.mxu0 0.0
        %1640 = vmatpush1.msra.mxu0 0.0
        %1641 = vmatprep.subr.mxu0 0.0
        %1642 = vmatpush1.msra.mxu0 0.0
        %1643 = vmatprep.subr.mxu0 0.0
        %1644 = vmatpush1.msra.mxu0 0.0
        %1645 = vmatprep.subr.mxu0 0.0
        %1646 = vmatpush1.msra.mxu0 0.0
        %1647 = vmatprep.subr.mxu0 0.0
        %1648 = vmatpush1.msra.mxu0 0.0
        %1649 = vmatprep.subr.mxu0 0.0
        %1650 = vmatpush1.msra.mxu0 0.0
        %1651 = vmatprep.subr.mxu0 0.0
        %1652 = vmatpush1.msra.mxu0 0.0
        %1653 = vmatprep.subr.mxu0 0.0
        %1654 = vmatpush1.msra.mxu0 0.0
        %1655 = vmatprep.subr.mxu0 0.0
        %1656 = vmatpush1.msra.mxu0 0.0
        %1657 = vmatprep.subr.mxu0 0.0
        %1658 = vmatpush1.msra.mxu0 0.0
        %1659 = vmatprep.subr.mxu0 0.0
        %1660 = vmatpush1.msra.mxu0 0.0
        %1661 = vmatprep.subr.mxu0 0.0
        %1662 = vmatpush1.msra.mxu0 0.0
        %1663 = vmatprep.subr.mxu0 0.0
        %1664 = vmatpush1.msra.mxu0 0.0
        %1665 = vmatprep.subr.mxu0 0.0
        %1666 = vmatpush1.msra.mxu0 0.0
        %1667 = vmatprep.subr.mxu0 0.0
        %1668 = vmatpush1.msra.mxu0 0.0
        %1669 = vmatprep.subr.mxu0 0.0
        %1670 = vmatpush1.msra.mxu0 0.0
        %1671 = vmatprep.subr.mxu0 0.0
        %1672 = vmatpush1.msra.mxu0 0.0
        %1673 = vmatprep.subr.mxu0 0.0
        %1674 = vmatpush1.msra.mxu0 0.0
        %1675 = vmatprep.subr.mxu0 0.0
        %1676 = vmatpush1.msra.mxu0 0.0
        %1677 = vmatprep.subr.mxu0 0.0
        %1678 = vmatpush1.msra.mxu0 0.0
        %1679 = vmatprep.subr.mxu0 0.0
        %1680 = vmatpush1.msra.mxu0 0.0
        %1681 = vmatprep.subr.mxu0 0.0
        %1682 = vmatpush1.msra.mxu0 0.0
        %1683 = vmatprep.subr.mxu0 0.0
        %1684 = vmatpush1.msra.mxu0 0.0
        %1685 = vmatprep.subr.mxu0 0.0
        %1686 = vmatpush1.msra.mxu0 0.0
        %1687 = vmatprep.subr.mxu0 0.0
        %1688 = vmatpush1.msra.mxu0 0.0
        %1689 = vmatprep.subr.mxu0 0.0
        %1690 = vmatpush1.msra.mxu0 0.0
        %1691 = vmatprep.subr.mxu0 0.0
        %1692 = vmatpush1.msra.mxu0 0.0
        %1693 = vmatprep.mubr.f32.mxu0 0.0
        %1694 = vmatmul.mubr.f32.gmra.mrb[0].mxu0 %v1624
        %v1695 = vpop.f32.mrb[0].mxu0
        %v1696 = vadd.f32 0.0, %v1695
        %v1697 = vpop.f32.mrb[0].mxu0
        %1698 = vmatprep.mubr.f32.mxu0 0.0
        %1699 = vmatmul.mubr.f32.gmra.mrb[0].mxu0 %v1627
        %v1700 = vpop.f32.mrb[0].mxu0
        %v1701 = vadd.f32 0.0, %v1700
        %v1702 = vpop.f32.mrb[0].mxu0
        %1703 = vdwg.mxu0
        %1704 = vrot.lane.b32.xlu0 %v411, 32
        %v1705 = vpop.permute.xlu0 %1704
        %1706 = vrot.lane.b32.xlu0 %v417, 32
        %v1707 = vpop.permute.xlu0 %1706
        %1708 = vrot.lane.b32.xlu0 %v413, 32
        %v1709 = vpop.permute.xlu0 %1708
        %1710 = vrot.lane.b32.xlu0 %v419, 32
        %v1711 = vpop.permute.xlu0 %1710
        %v1712 = vsel %vm518, %v1705, 0
        %v1714 = vsel %vm518, %v1707, 0
        %v1716 = vsel %vm518, %v1709, 0
        %v1718 = vsel %vm518, %v1711, 0
        %1720 = vmatprep.subr.mxu0 0.0
        %1721 = vmatpush1.xpose.msra.mxu0 %v1716
        %1722 = vmatprep.subr.mxu0 0.0
        %1723 = vmatpush1.xpose.msra.mxu0 %v1718
        %1724 = vmatprep.subr.mxu0 0.0
        %1725 = vmatpush1.xpose.msra.mxu0 0.0
        %1726 = vmatprep.subr.mxu0 0.0
        %1727 = vmatpush1.xpose.msra.mxu0 0.0
        %1728 = vmatprep.subr.mxu0 0.0
        %1729 = vmatpush1.xpose.msra.mxu0 0.0
        %1730 = vmatprep.subr.mxu0 0.0
        %1731 = vmatpush1.xpose.msra.mxu0 0.0
        %1732 = vmatprep.subr.mxu0 0.0
        %1733 = vmatpush1.xpose.msra.mxu0 0.0
        %1734 = vmatprep.subr.mxu0 0.0
        %1735 = vmatpush1.xpose.msra.mxu0 0.0
        %1736 = vmatprep.subr.mxu0 0.0
        %1737 = vmatpush1.xpose.msra.mxu0 0.0
        %1738 = vmatprep.subr.mxu0 0.0
        %1739 = vmatpush1.xpose.msra.mxu0 0.0
        %1740 = vmatprep.subr.mxu0 0.0
        %1741 = vmatpush1.xpose.msra.mxu0 0.0
        %1742 = vmatprep.subr.mxu0 0.0
        %1743 = vmatpush1.xpose.msra.mxu0 0.0
        %1744 = vmatprep.subr.mxu0 0.0
        %1745 = vmatpush1.xpose.msra.mxu0 0.0
        %1746 = vmatprep.subr.mxu0 0.0
        %1747 = vmatpush1.xpose.msra.mxu0 0.0
        %1748 = vmatprep.subr.mxu0 0.0
        %1749 = vmatpush1.xpose.msra.mxu0 0.0
        %1750 = vmatprep.subr.mxu0 0.0
        %1751 = vmatpush1.xpose.msra.mxu0 0.0
        %1752 = vmatprep.subr.mxu0 0.0
        %1753 = vmatpush1.xpose.msra.mxu0 0.0
        %1754 = vmatprep.subr.mxu0 0.0
        %1755 = vmatpush1.xpose.msra.mxu0 0.0
        %1756 = vmatprep.subr.mxu0 0.0
        %1757 = vmatpush1.xpose.msra.mxu0 0.0
        %1758 = vmatprep.subr.mxu0 0.0
        %1759 = vmatpush1.xpose.msra.mxu0 0.0
        %1760 = vmatprep.subr.mxu0 0.0
        %1761 = vmatpush1.xpose.msra.mxu0 0.0
        %1762 = vmatprep.subr.mxu0 0.0
        %1763 = vmatpush1.xpose.msra.mxu0 0.0
        %1764 = vmatprep.subr.mxu0 0.0
        %1765 = vmatpush1.xpose.msra.mxu0 0.0
        %1766 = vmatprep.subr.mxu0 0.0
        %1767 = vmatpush1.xpose.msra.mxu0 0.0
        %1768 = vmatprep.subr.mxu0 0.0
        %1769 = vmatpush1.xpose.msra.mxu0 0.0
        %1770 = vmatprep.subr.mxu0 0.0
        %1771 = vmatpush1.xpose.msra.mxu0 0.0
        %1772 = vmatprep.subr.mxu0 0.0
        %1773 = vmatpush1.xpose.msra.mxu0 0.0
        %1774 = vmatprep.subr.mxu0 0.0
        %1775 = vmatpush1.xpose.msra.mxu0 0.0
        %1776 = vmatprep.subr.mxu0 0.0
        %1777 = vmatpush1.xpose.msra.mxu0 0.0
        %1778 = vmatprep.subr.mxu0 0.0
        %1779 = vmatpush1.xpose.msra.mxu0 0.0
        %1780 = vmatprep.subr.mxu0 0.0
        %1781 = vmatpush1.xpose.msra.mxu0 0.0
        %1782 = vmatprep.subr.mxu0 0.0
        %1783 = vmatpush1.xpose.msra.mxu0 0.0
        %1784 = vmatprep.mubr.f32.mxu0 0.0
        %1785 = vmatmul.mubr.f32.gmra.mrb[0].mxu0 %v1712
        %v1786 = vpop.f32.mrb[0].mxu0
        %v1787 = vadd.f32 0.0, %v1786
        %v1788 = vpop.f32.mrb[0].mxu0
        %1789 = vmatprep.mubr.f32.mxu0 0.0
        %1790 = vmatmul.mubr.f32.gmra.mrb[0].mxu0 %v1714
        %v1791 = vpop.f32.mrb[0].mxu0
        %v1792 = vadd.f32 0.0, %v1791
        %v1793 = vpop.f32.mrb[0].mxu0
        %1794 = vdwg.mxu0
        %1795 = vrot.lane.b32.xlu0 %v423, 32
        %v1796 = vpop.permute.xlu0 %1795
        %1797 = vrot.lane.b32.xlu0 %v429, 32
        %v1798 = vpop.permute.xlu0 %1797
        %1799 = vrot.lane.b32.xlu0 %v425, 32
        %v1800 = vpop.permute.xlu0 %1799
        %1801 = vrot.lane.b32.xlu0 %v431, 32
        %v1802 = vpop.permute.xlu0 %1801
        %v1803 = vsel %vm518, %v1796, 0
        %v1805 = vsel %vm518, %v1798, 0
        %v1807 = vsel %vm518, %v1800, 0
        %v1809 = vsel %vm518, %v1802, 0
        %1811 = vmatprep.subr.mxu0 0.0
        %1812 = vmatpush1.xpose.msra.mxu0 %v1807
        %1813 = vmatprep.subr.mxu0 0.0
        %1814 = vmatpush1.xpose.msra.mxu0 %v1809
        %1815 = vmatprep.subr.mxu0 0.0
        %1816 = vmatpush1.xpose.msra.mxu0 0.0
        %1817 = vmatprep.subr.mxu0 0.0
        %1818 = vmatpush1.xpose.msra.mxu0 0.0
        %1819 = vmatprep.subr.mxu0 0.0
        %1820 = vmatpush1.xpose.msra.mxu0 0.0
        %1821 = vmatprep.subr.mxu0 0.0
        %1822 = vmatpush1.xpose.msra.mxu0 0.0
        %1823 = vmatprep.subr.mxu0 0.0
        %1824 = vmatpush1.xpose.msra.mxu0 0.0
        %1825 = vmatprep.subr.mxu0 0.0
        %1826 = vmatpush1.xpose.msra.mxu0 0.0
        %1827 = vmatprep.subr.mxu0 0.0
        %1828 = vmatpush1.xpose.msra.mxu0 0.0
        %1829 = vmatprep.subr.mxu0 0.0
        %1830 = vmatpush1.xpose.msra.mxu0 0.0
        %1831 = vmatprep.subr.mxu0 0.0
        %1832 = vmatpush1.xpose.msra.mxu0 0.0
        %1833 = vmatprep.subr.mxu0 0.0
        %1834 = vmatpush1.xpose.msra.mxu0 0.0
        %1835 = vmatprep.subr.mxu0 0.0
        %1836 = vmatpush1.xpose.msra.mxu0 0.0
        %1837 = vmatprep.subr.mxu0 0.0
        %1838 = vmatpush1.xpose.msra.mxu0 0.0
        %1839 = vmatprep.subr.mxu0 0.0
        %1840 = vmatpush1.xpose.msra.mxu0 0.0
        %1841 = vmatprep.subr.mxu0 0.0
        %1842 = vmatpush1.xpose.msra.mxu0 0.0
        %1843 = vmatprep.subr.mxu0 0.0
        %1844 = vmatpush1.xpose.msra.mxu0 0.0
        %1845 = vmatprep.subr.mxu0 0.0
        %1846 = vmatpush1.xpose.msra.mxu0 0.0
        %1847 = vmatprep.subr.mxu0 0.0
        %1848 = vmatpush1.xpose.msra.mxu0 0.0
        %1849 = vmatprep.subr.mxu0 0.0
        %1850 = vmatpush1.xpose.msra.mxu0 0.0
        %1851 = vmatprep.subr.mxu0 0.0
        %1852 = vmatpush1.xpose.msra.mxu0 0.0
        %1853 = vmatprep.subr.mxu0 0.0
        %1854 = vmatpush1.xpose.msra.mxu0 0.0
        %1855 = vmatprep.subr.mxu0 0.0
        %1856 = vmatpush1.xpose.msra.mxu0 0.0
        %1857 = vmatprep.subr.mxu0 0.0
        %1858 = vmatpush1.xpose.msra.mxu0 0.0
        %1859 = vmatprep.subr.mxu0 0.0
        %1860 = vmatpush1.xpose.msra.mxu0 0.0
        %1861 = vmatprep.subr.mxu0 0.0
        %1862 = vmatpush1.xpose.msra.mxu0 0.0
        %1863 = vmatprep.subr.mxu0 0.0
        %1864 = vmatpush1.xpose.msra.mxu0 0.0
        %1865 = vmatprep.subr.mxu0 0.0
        %1866 = vmatpush1.xpose.msra.mxu0 0.0
        %1867 = vmatprep.subr.mxu0 0.0
        %1868 = vmatpush1.xpose.msra.mxu0 0.0
        %1869 = vmatprep.subr.mxu0 0.0
        %1870 = vmatpush1.xpose.msra.mxu0 0.0
        %1871 = vmatprep.subr.mxu0 0.0
        %1872 = vmatpush1.xpose.msra.mxu0 0.0
        %1873 = vmatprep.subr.mxu0 0.0
        %1874 = vmatpush1.xpose.msra.mxu0 0.0
        %1875 = vmatprep.mubr.f32.mxu0 0.0
        %1876 = vmatmul.mubr.f32.gmra.mrb[0].mxu0 %v1803
        %v1877 = vpop.f32.mrb[0].mxu0
        %v1878 = vadd.f32 0.0, %v1877
        %v1879 = vpop.f32.mrb[0].mxu0
        %1880 = vmatprep.mubr.f32.mxu0 0.0
        %1881 = vmatmul.mubr.f32.gmra.mrb[0].mxu0 %v1805
        %v1882 = vpop.f32.mrb[0].mxu0
        %v1883 = vadd.f32 0.0, %v1882
        %v1884 = vpop.f32.mrb[0].mxu0
        %1885 = vdwg.mxu0
        %v1886 = vsel %vm693, %v1787, -inf
        %1887 = vmax.xlane.f32.xlu0 %v1886
        %v1888 = vpop.xlane.xlu0 %1887
        %v1889 = vsel %vm693, %v1792, -inf
        %1890 = vmax.xlane.f32.xlu0 %v1889
        %v1891 = vpop.xlane.xlu0 %1890
        %v1892 = vsel %vm693, %v1878, -inf
        %1893 = vmax.xlane.f32.xlu0 %v1892
        %v1894 = vpop.xlane.xlu0 %1893
        %v1895 = vsel %vm693, %v1883, -inf
        %1896 = vmax.xlane.f32.xlu0 %v1895
        %v1897 = vpop.xlane.xlu0 %1896
        %v1898 = vsub.f32 %v1787, %v1888
        %v1899 = vsub.f32 %v1792, %v1891
        %v1900 = vsub.f32 %v1878, %v1894
        %v1901 = vsub.f32 %v1883, %v1897
        %v1902 = vmul.f32 %v1898, 1.442695
        %v1903 = vpow.pop %v1902
        %v1904 = vmul.f32 %v1899, 1.442695
        %v1905 = vpow.pop %v1904
        %v1906 = vmul.f32 %v1900, 1.442695
        %v1907 = vpow.pop %v1906
        %v1908 = vmul.f32 %v1901, 1.442695
        %v1909 = vpow.pop %v1908
        %v1910 = vsel %vm693, %v1903, 0.0
        %1911 = vadd.xlane.f32.xlu0 %v1910
        %v1912 = vpop.xlane.xlu0 %1911
        %v1913 = vsel %vm693, %v1905, 0.0
        %1914 = vadd.xlane.f32.xlu0 %v1913
        %v1915 = vpop.xlane.xlu0 %1914
        %v1916 = vsel %vm693, %v1907, 0.0
        %1917 = vadd.xlane.f32.xlu0 %v1916
        %v1918 = vpop.xlane.xlu0 %1917
        %v1919 = vsel %vm693, %v1909, 0.0
        %1920 = vadd.xlane.f32.xlu0 %v1919
        %v1921 = vpop.xlane.xlu0 %1920
        %v1922 = vrcp.pop %v1912
        %v1923 = vrcp.pop %v1915
        %v1924 = vrcp.pop %v1918
        %v1925 = vrcp.pop %v1921
        %v1926 = vmul.f32 %v1903, %v1922
        %v1927 = vmul.f32 %v1905, %v1923
        %v1928 = vmul.f32 %v1907, %v1924
        %v1929 = vmul.f32 %v1909, %v1925
        %1930 = vrot.lane.b32.xlu0 %v500, 32
        %v1931 = vpop.permute.xlu0 %1930
        %1932 = vrot.lane.b32.xlu0 %v505, 32
        %v1933 = vpop.permute.xlu0 %1932
        %v1937 = vsel %vm693, %v1926, 0
        %v1940 = vsel %vm693, %v1927, 0
        %1942 = vmatprep.subr.mxu0 0.0
        %1943 = vmatpush1.msra.mxu0 %v1931
        %1944 = vmatprep.subr.mxu0 0.0
        %1945 = vmatpush1.msra.mxu0 %v1933
        %1946 = vmatprep.subr.mxu0 0.0
        %1947 = vmatpush1.msra.mxu0 0.0
        %1948 = vmatprep.subr.mxu0 0.0
        %1949 = vmatpush1.msra.mxu0 0.0
        %1950 = vmatprep.subr.mxu0 0.0
        %1951 = vmatpush1.msra.mxu0 0.0
        %1952 = vmatprep.subr.mxu0 0.0
        %1953 = vmatpush1.msra.mxu0 0.0
        %1954 = vmatprep.subr.mxu0 0.0
        %1955 = vmatpush1.msra.mxu0 0.0
        %1956 = vmatprep.subr.mxu0 0.0
        %1957 = vmatpush1.msra.mxu0 0.0
        %1958 = vmatprep.subr.mxu0 0.0
        %1959 = vmatpush1.msra.mxu0 0.0
        %1960 = vmatprep.subr.mxu0 0.0
        %1961 = vmatpush1.msra.mxu0 0.0
        %1962 = vmatprep.subr.mxu0 0.0
        %1963 = vmatpush1.msra.mxu0 0.0
        %1964 = vmatprep.subr.mxu0 0.0
        %1965 = vmatpush1.msra.mxu0 0.0
        %1966 = vmatprep.subr.mxu0 0.0
        %1967 = vmatpush1.msra.mxu0 0.0
        %1968 = vmatprep.subr.mxu0 0.0
        %1969 = vmatpush1.msra.mxu0 0.0
        %1970 = vmatprep.subr.mxu0 0.0
        %1971 = vmatpush1.msra.mxu0 0.0
        %1972 = vmatprep.subr.mxu0 0.0
        %1973 = vmatpush1.msra.mxu0 0.0
        %1974 = vmatprep.subr.mxu0 0.0
        %1975 = vmatpush1.msra.mxu0 0.0
        %1976 = vmatprep.subr.mxu0 0.0
        %1977 = vmatpush1.msra.mxu0 0.0
        %1978 = vmatprep.subr.mxu0 0.0
        %1979 = vmatpush1.msra.mxu0 0.0
        %1980 = vmatprep.subr.mxu0 0.0
        %1981 = vmatpush1.msra.mxu0 0.0
        %1982 = vmatprep.subr.mxu0 0.0
        %1983 = vmatpush1.msra.mxu0 0.0
        %1984 = vmatprep.subr.mxu0 0.0
        %1985 = vmatpush1.msra.mxu0 0.0
        %1986 = vmatprep.subr.mxu0 0.0
        %1987 = vmatpush1.msra.mxu0 0.0
        %1988 = vmatprep.subr.mxu0 0.0
        %1989 = vmatpush1.msra.mxu0 0.0
        %1990 = vmatprep.subr.mxu0 0.0
        %1991 = vmatpush1.msra.mxu0 0.0
        %1992 = vmatprep.subr.mxu0 0.0
        %1993 = vmatpush1.msra.mxu0 0.0
        %1994 = vmatprep.subr.mxu0 0.0
        %1995 = vmatpush1.msra.mxu0 0.0
        %1996 = vmatprep.subr.mxu0 0.0
        %1997 = vmatpush1.msra.mxu0 0.0
        %1998 = vmatprep.subr.mxu0 0.0
        %1999 = vmatpush1.msra.mxu0 0.0
        %2000 = vmatprep.subr.mxu0 0.0
        %2001 = vmatpush1.msra.mxu0 0.0
        %2002 = vmatprep.subr.mxu0 0.0
        %2003 = vmatpush1.msra.mxu0 0.0
        %2004 = vmatprep.subr.mxu0 0.0
        %2005 = vmatpush1.msra.mxu0 0.0
        %2006 = vmatprep.mubr.f32.mxu0 0.0
        %2007 = vmatmul.mubr.f32.gmra.mrb[0].mxu0 %v1937
        %v2008 = vpop.f32.mrb[0].mxu0
        %v2009 = vadd.f32 0.0, %v2008
        %v2010 = vpop.f32.mrb[0].mxu0
        %2011 = vmatprep.mubr.f32.mxu0 0.0
        %2012 = vmatmul.mubr.f32.gmra.mrb[0].mxu0 %v1940
        %v2013 = vpop.f32.mrb[0].mxu0
        %v2014 = vadd.f32 0.0, %v2013
        %v2015 = vpop.f32.mrb[0].mxu0
        %2016 = vdwg.mxu0
        %2017 = vrot.lane.b32.xlu0 %v510, 32
        %v2018 = vpop.permute.xlu0 %2017
        %2019 = vrot.lane.b32.xlu0 %v515, 32
        %v2020 = vpop.permute.xlu0 %2019
        %v2024 = vsel %vm693, %v1928, 0
        %v2027 = vsel %vm693, %v1929, 0
        %2029 = vmatprep.subr.mxu0 0.0
        %2030 = vmatpush1.msra.mxu0 %v2018
        %2031 = vmatprep.subr.mxu0 0.0
        %2032 = vmatpush1.msra.mxu0 %v2020
        %2033 = vmatprep.subr.mxu0 0.0
        %2034 = vmatpush1.msra.mxu0 0.0
        %2035 = vmatprep.subr.mxu0 0.0
        %2036 = vmatpush1.msra.mxu0 0.0
        %2037 = vmatprep.subr.mxu0 0.0
        %2038 = vmatpush1.msra.mxu0 0.0
        %2039 = vmatprep.subr.mxu0 0.0
        %2040 = vmatpush1.msra.mxu0 0.0
        %2041 = vmatprep.subr.mxu0 0.0
        %2042 = vmatpush1.msra.mxu0 0.0
        %2043 = vmatprep.subr.mxu0 0.0
        %2044 = vmatpush1.msra.mxu0 0.0
        %2045 = vmatprep.subr.mxu0 0.0
        %2046 = vmatpush1.msra.mxu0 0.0
        %2047 = vmatprep.subr.mxu0 0.0
        %2048 = vmatpush1.msra.mxu0 0.0
        %2049 = vmatprep.subr.mxu0 0.0
        %2050 = vmatpush1.msra.mxu0 0.0
        %2051 = vmatprep.subr.mxu0 0.0
        %2052 = vmatpush1.msra.mxu0 0.0
        %2053 = vmatprep.subr.mxu0 0.0
        %2054 = vmatpush1.msra.mxu0 0.0
        %2055 = vmatprep.subr.mxu0 0.0
        %2056 = vmatpush1.msra.mxu0 0.0
        %2057 = vmatprep.subr.mxu0 0.0
        %2058 = vmatpush1.msra.mxu0 0.0
        %2059 = vmatprep.subr.mxu0 0.0
        %2060 = vmatpush1.msra.mxu0 0.0
        %2061 = vmatprep.subr.mxu0 0.0
        %2062 = vmatpush1.msra.mxu0 0.0
        %2063 = vmatprep.subr.mxu0 0.0
        %2064 = vmatpush1.msra.mxu0 0.0
        %2065 = vmatprep.subr.mxu0 0.0
        %2066 = vmatpush1.msra.mxu0 0.0
        %2067 = vmatprep.subr.mxu0 0.0
        %2068 = vmatpush1.msra.mxu0 0.0
        %2069 = vmatprep.subr.mxu0 0.0
        %2070 = vmatpush1.msra.mxu0 0.0
        %2071 = vmatprep.subr.mxu0 0.0
        %2072 = vmatpush1.msra.mxu0 0.0
        %2073 = vmatprep.subr.mxu0 0.0
        %2074 = vmatpush1.msra.mxu0 0.0
        %2075 = vmatprep.subr.mxu0 0.0
        %2076 = vmatpush1.msra.mxu0 0.0
        %2077 = vmatprep.subr.mxu0 0.0
        %2078 = vmatpush1.msra.mxu0 0.0
        %2079 = vmatprep.subr.mxu0 0.0
        %2080 = vmatpush1.msra.mxu0 0.0
        %2081 = vmatprep.subr.mxu0 0.0
        %2082 = vmatpush1.msra.mxu0 0.0
        %2083 = vmatprep.subr.mxu0 0.0
        %2084 = vmatpush1.msra.mxu0 0.0
        %2085 = vmatprep.subr.mxu0 0.0
        %2086 = vmatpush1.msra.mxu0 0.0
        %2087 = vmatprep.subr.mxu0 0.0
        %2088 = vmatpush1.msra.mxu0 0.0
        %2089 = vmatprep.subr.mxu0 0.0
        %2090 = vmatpush1.msra.mxu0 0.0
        %2091 = vmatprep.subr.mxu0 0.0
        %2092 = vmatpush1.msra.mxu0 0.0
        %2093 = vmatprep.mubr.f32.mxu0 0.0
        %2094 = vmatmul.mubr.f32.gmra.mrb[0].mxu0 %v2024
        %v2095 = vpop.f32.mrb[0].mxu0
        %v2096 = vadd.f32 0.0, %v2095
        %v2097 = vpop.f32.mrb[0].mxu0
        %2098 = vmatprep.mubr.f32.mxu0 0.0
        %2099 = vmatmul.mubr.f32.gmra.mrb[0].mxu0 %v2027
        %v2100 = vpop.f32.mrb[0].mxu0
        %v2101 = vadd.f32 0.0, %v2100
        %v2102 = vpop.f32.mrb[0].mxu0
        %2103 = vdwg.mxu0
        %2108 = vrot.lane.b32.xlu0 %v1207, 32
        %v2109 = vpop.permute.xlu0 %2108
        %2110 = vrot.lane.b32.xlu0 %v1212, 32
        %v2111 = vpop.permute.xlu0 %2110
        %2112 = vrot.lane.b32.xlu0 %v1296, 32
        %v2113 = vpop.permute.xlu0 %2112
        %2114 = vrot.lane.b32.xlu0 %v1301, 32
        %v2115 = vpop.permute.xlu0 %2114
        %2124 = vrot.lane.b32.xlu0 %v1609, 64
        %v2125 = vpop.permute.xlu0 %2124
        %2126 = vrot.lane.b32.xlu0 %v1614, 64
        %v2127 = vpop.permute.xlu0 %2126
        %2128 = vrot.lane.b32.xlu0 %v1696, 64
        %v2129 = vpop.permute.xlu0 %2128
        %2130 = vrot.lane.b32.xlu0 %v1701, 64
        %v2131 = vpop.permute.xlu0 %2130
        %2140 = vrot.lane.b32.xlu0 %v2009, 96
        %v2141 = vpop.permute.xlu0 %2140
        %2142 = vrot.lane.b32.xlu0 %v2014, 96
        %v2143 = vpop.permute.xlu0 %2142
        %2144 = vrot.lane.b32.xlu0 %v2096, 96
        %v2145 = vpop.permute.xlu0 %2144
        %2146 = vrot.lane.b32.xlu0 %v2101, 96
        %v2147 = vpop.permute.xlu0 %2146
        %v2152 = vsel %vm518, %v811, %v2109
        %v2153 = vsel %vm518, %v816, %v2111
        %v2154 = vsel %vm518, %v892, %v2113
        %v2155 = vsel %vm518, %v897, %v2115
        %vm2156 = vcmask 523264
        %v2157 = vsel %vm2156, %v2152, %v2125
        %v2158 = vsel %vm2156, %v2153, %v2127
        %v2159 = vsel %vm2156, %v2154, %v2129
        %v2160 = vsel %vm2156, %v2155, %v2131
        %vm2161 = vcmask 785408
        %v2162 = vsel %vm2161, %v2157, %v2141
        %v2163 = vsel %vm2161, %v2158, %v2143
        %v2164 = vsel %vm2161, %v2159, %v2145
        %v2165 = vsel %vm2161, %v2160, %v2147
        %v2166 = vld [vmem:[#allocation7] sm:$0xff]
        %v2167 = vld [vmem:[#allocation7 + $0x8] sm:$0xff]
        %v2168 = vld [vmem:[#allocation7 + $0x10] sm:$0xff]
        %v2169 = vld [vmem:[#allocation7 + $0x18] sm:$0xff]
        %v2170 = vld [vmem:[#allocation7 + $0x20] sm:$0xff]
        %v2171 = vld [vmem:[#allocation7 + $0x28] sm:$0xff]
        %v2172 = vld [vmem:[#allocation7 + $0x30] sm:$0xff]
        %v2173 = vld [vmem:[#allocation7 + $0x38] sm:$0xff]
        %v2174 = vld [vmem:[#allocation7 + $0x40] sm:$0xff]
        %v2175 = vld [vmem:[#allocation7 + $0x48] sm:$0xff]
        %v2176 = vld [vmem:[#allocation7 + $0x50] sm:$0xff]
        %v2177 = vld [vmem:[#allocation7 + $0x58] sm:$0xff]
        %v2178 = vld [vmem:[#allocation7 + $0x60] sm:$0xff]
        %v2179 = vld [vmem:[#allocation7 + $0x68] sm:$0xff]
        %v2180 = vld [vmem:[#allocation7 + $0x70] sm:$0xff]
        %v2181 = vld [vmem:[#allocation7 + $0x78] sm:$0xff]
        %v2182 = vld [vmem:[%s4] sm:$0x1]
        %v2184 = vlaneseq
        %v2185 = vshrl.u32 %v2184, 7
        %v2186 = vsub.s32 0, %v2185
        %v2187 = vrot.slane %v2182, %v2186
        %2189 = vmatprep.subr.mxu0 0.0
        %2190 = vmatpush1.msra.mxu0 %v2166
        %2191 = vmatprep.subr.mxu0 0.0
        %2192 = vmatpush1.msra.mxu0 %v2167
        %2193 = vmatprep.subr.mxu0 0.0
        %2194 = vmatpush1.msra.mxu0 %v2168
        %2195 = vmatprep.subr.mxu0 0.0
        %2196 = vmatpush1.msra.mxu0 %v2169
        %2197 = vmatprep.subr.mxu0 0.0
        %2198 = vmatpush1.msra.mxu0 %v2170
        %2199 = vmatprep.subr.mxu0 0.0
        %2200 = vmatpush1.msra.mxu0 %v2171
        %2201 = vmatprep.subr.mxu0 0.0
        %2202 = vmatpush1.msra.mxu0 %v2172
        %2203 = vmatprep.subr.mxu0 0.0
        %2204 = vmatpush1.msra.mxu0 %v2173
        %2205 = vmatprep.subr.mxu0 0.0
        %2206 = vmatpush1.msra.mxu0 %v2174
        %2207 = vmatprep.subr.mxu0 0.0
        %2208 = vmatpush1.msra.mxu0 %v2175
        %2209 = vmatprep.subr.mxu0 0.0
        %2210 = vmatpush1.msra.mxu0 %v2176
        %2211 = vmatprep.subr.mxu0 0.0
        %2212 = vmatpush1.msra.mxu0 %v2177
        %2213 = vmatprep.subr.mxu0 0.0
        %2214 = vmatpush1.msra.mxu0 %v2178
        %2215 = vmatprep.subr.mxu0 0.0
        %2216 = vmatpush1.msra.mxu0 %v2179
        %2217 = vmatprep.subr.mxu0 0.0
        %2218 = vmatpush1.msra.mxu0 %v2180
        %2219 = vmatprep.subr.mxu0 0.0
        %2220 = vmatpush1.msra.mxu0 %v2181
        %2221 = vmatprep.subr.mxu0 0.0
        %2222 = vmatpush1.msra.mxu0 0.0
        %2223 = vmatprep.subr.mxu0 0.0
        %2224 = vmatpush1.msra.mxu0 0.0
        %2225 = vmatprep.subr.mxu0 0.0
        %2226 = vmatpush1.msra.mxu0 0.0
        %2227 = vmatprep.subr.mxu0 0.0
        %2228 = vmatpush1.msra.mxu0 0.0
        %2229 = vmatprep.subr.mxu0 0.0
        %2230 = vmatpush1.msra.mxu0 0.0
        %2231 = vmatprep.subr.mxu0 0.0
        %2232 = vmatpush1.msra.mxu0 0.0
        %2233 = vmatprep.subr.mxu0 0.0
        %2234 = vmatpush1.msra.mxu0 0.0
        %2235 = vmatprep.subr.mxu0 0.0
        %2236 = vmatpush1.msra.mxu0 0.0
        %2237 = vmatprep.subr.mxu0 0.0
        %2238 = vmatpush1.msra.mxu0 0.0
        %2239 = vmatprep.subr.mxu0 0.0
        %2240 = vmatpush1.msra.mxu0 0.0
        %2241 = vmatprep.subr.mxu0 0.0
        %2242 = vmatpush1.msra.mxu0 0.0
        %2243 = vmatprep.subr.mxu0 0.0
        %2244 = vmatpush1.msra.mxu0 0.0
        %2245 = vmatprep.subr.mxu0 0.0
        %2246 = vmatpush1.msra.mxu0 0.0
        %2247 = vmatprep.subr.mxu0 0.0
        %2248 = vmatpush1.msra.mxu0 0.0
        %2249 = vmatprep.subr.mxu0 0.0
        %2250 = vmatpush1.msra.mxu0 0.0
        %2251 = vmatprep.subr.mxu0 0.0
        %2252 = vmatpush1.msra.mxu0 0.0
        %2253 = vmatprep.mubr.f32.mxu0 0.0
        %2254 = vmatmul.mubr.f32.gmra.mrb[0].mxu0 %v2162
        %v2255 = vpop.f32.mrb[0].mxu0
        %v2256 = vadd.f32 %v2187, %v2255
        %v2257 = vpop.f32.mrb[0].mxu0
        %2258 = vmatprep.mubr.f32.mxu0 0.0
        %2259 = vmatmul.mubr.f32.gmra.mrb[0].mxu0 %v2163
        %v2260 = vpop.f32.mrb[0].mxu0
        %v2261 = vadd.f32 %v2187, %v2260
        %v2262 = vpop.f32.mrb[0].mxu0
        %2263 = vmatprep.mubr.f32.mxu0 0.0
        %2264 = vmatmul.mubr.f32.gmra.mrb[0].mxu0 %v2164
        %v2265 = vpop.f32.mrb[0].mxu0
        %v2266 = vadd.f32 %v2187, %v2265
        %v2267 = vpop.f32.mrb[0].mxu0
        %2268 = vmatprep.mubr.f32.mxu0 0.0
        %2269 = vmatmul.mubr.f32.gmra.mrb[0].mxu0 %v2165
        %v2270 = vpop.f32.mrb[0].mxu0
        %v2271 = vadd.f32 %v2187, %v2270
        %v2272 = vpop.f32.mrb[0].mxu0
        %2273 = vdwg.mxu0
        %2274 = vst [vmem:[%s272] sm:$0xff] %v2256
        %2275 = vst [vmem:[%s272 + $0x8] sm:$0xff] %v2261
        %2276 = vst [vmem:[%s272 + $0x10] sm:$0xff] %v2266
        %2277 = vst [vmem:[%s272 + $0x18] sm:$0xff] %v2271
        %s2278 = sand.u32 %s141, 1
        %s2279 = scalar_lea.sflag [#allocation4], %s2278
        %s2280 = sand.u32 %s141, 1
        %s2281 = smul.addr %s2280, 32
        %s2282 = scalar_lea.vmem [#allocation8], %s2281
        // Predicated region
        $region53: #{tpu_custom_call.1} parent=39 // pred_check
          %p2283 = pneg %p151
        $region54: #{tpu_custom_call.1} parent=39 // pred_check_branch
          %2285 = sbr.rel (%p2283) target = $region56
        $region55: #{tpu_custom_call.1} parent=39 // pred_region
          %s2286 = smul.u32 2, %s23
          %s2288 = ssub.s32 512, 512
          %2289 = vsyncadd %s2279, %s2288
          %s2290 = smul.addr %s2286, 2
          %s2291 = smul.addr %s2290, 128
          %s2292 = scalar_lea.hbm %s5, %s2291
          %s2293 = sshll.u32 %s2282, 4
          %s2294 = int_to_ptr.vmem [resolvable:$true] %s2293
          %2299 = dma.vmem_to_hbm [thread:$0]  %s2294, 512, %s2292, %s2279, 128, 128, 8
        $region56: #{tpu_custom_call.1} parent=39 // pred_fallthru
          _
      $region40: #{tpu_custom_call.1} parent=5 // pred_fallthru
        _
      %p2300 = scmp.le.s32.totalorder 2, %s18
      // Predicated region
      $region57: #{tpu_custom_call.1} parent=5 // pred_check
        %p2301 = pneg %p2300
      $region58: #{tpu_custom_call.1} parent=5 // pred_check_branch
        %2303 = sbr.rel (%p2301) target = $region60
      $region59: #{tpu_custom_call.1} parent=5 // pred_region
        %s2304 = ssub.s32 %s18, 2
        // Predicated region
        $region61: #{tpu_custom_call.1} parent=59 // pred_check
          %p2305 = pneg %p157
        $region62: #{tpu_custom_call.1} parent=59 // pred_check_branch
          %2307 = sbr.rel (%p2305) target = $region64
        $region63: #{tpu_custom_call.1} parent=59 // pred_region
          %s2308 = sand.u32 %s142, 1
          %s2309 = scalar_lea.sflag [#allocation4], %s2308
          %s2310 = sand.u32 %s142, 1
          %s2311 = smul.addr %s2310, 32
          %s2312 = scalar_lea.vmem [#allocation8], %s2311
          %2313 = dma.done %s2309, 512
        $region64: #{tpu_custom_call.1} parent=59 // pred_fallthru
          _
      $region60: #{tpu_custom_call.1} parent=5 // pred_fallthru
        _
    $region6: #{tpu_custom_call.1} parent=1 // loop_footer
      %s22 = sadd.s32 1, %s18
    $region7: #{tpu_custom_call.1} parent=1 // loop_footer_branch
      %17 = sbr.rel target = $region3
    $region8: #{tpu_custom_call.1} parent=1 // loop_exit
      _
    %2314 = vsyncpa [#allocation3], 1
    %s2315 = scalar_lea.sflag [#allocation3], 1
    %2316 = vsyncpa %s2315, 1
    %2317 = vsyncpa [#allocation6], 1
    %2318 = vsyncpa [#allocation4], 1
    %s2319 = scalar_lea.sflag [#allocation4], 1
    %2320 = vsyncpa %s2319, 1

</llo_original>
